<compile_context>
chip_gen: v5e
topology: v5e:2x2
jax: 0.10.0
libtpu: 0.0.40
codegen_flags: <defaults>
</compile_context>

<pallas_src>
import math
import functools

import jax
import jax.numpy as jnp
from jax import lax
from jax.experimental import pallas as pl
from jax.experimental.pallas import tpu as pltpu


def _vmem_capacity_bytes():
    """Physical VMEM per TensorCore (128 MiB v5e/v6e, 64 MiB v7x)."""
    try:
        info = pltpu.get_tpu_info()
        for attr in ("vmem_capacity_bytes", "vmem_size_bytes", "vmem_bytes"):
            v = getattr(info, attr, None)
            if v:
                return int(v)
    except Exception:
        pass
    return 64 * 1024 * 1024  # conservative default (v7x per-TC VMEM)


def _derive_group_size(T1, T2, C, mm_bytes, out_bytes, budget_bytes):
    """Largest bn-group size G whose per-step working set fits the budget."""
    # Constant cost: 4 CxC weights (single-buffered) + 4 padded bias rows.
    weight_bytes = 4 * C * C * mm_bytes + 4 * 8 * max(C, 128) * 4
    # Per-G cost (per bn row in the group).
    per_g = (
        2 * T1 * C * mm_bytes            # x1 block, double-buffered
        + 2 * T2 * C * mm_bytes          # x2 block, double-buffered
        + 2 * T1 * C * out_bytes         # output block, double-buffered
        + (T1 + 2 * T2) * C * 4          # f32 q/k/v projection results
        + (T1 + 2 * T2) * C * mm_bytes   # matmul-dtype copies q3/k3/v3
        + T1 * T2 * 4                    # per-head f32 score buffer (one live)
        + 2 * T1 * C * 4                 # head output + f32 accumulator
    )
    return int(max(1, (budget_bytes - weight_bytes) // per_g))


def _mca_kernel(x1_ref, x2_ref,
                wq_ref, bq_ref, wk_ref, bk_ref,
                wv_ref, bv_ref, wu_ref, bu_ref,
                o_ref, *, num_heads, scale, matmul_dtype):
    G, T1, C = x1_ref.shape
    _, T2, _ = x2_ref.shape
    dh = C // num_heads
    md = matmul_dtype

    # (G, T, C) -> (G*T, C): leading-dim merge, layout preserving.
    x1 = x1_ref[...].reshape(G * T1, C)
    x2 = x2_ref[...].reshape(G * T2, C)

    # Q/K/V projections: single big MXU matmuls over all G*T rows,
    # f32 accumulation, f32 bias add.
    q = jnp.dot(x1, wq_ref[...], preferred_element_type=jnp.float32) + bq_ref[...]
    k = jnp.dot(x2, wk_ref[...], preferred_element_type=jnp.float32) + bk_ref[...]
    v = jnp.dot(x2, wv_ref[...], preferred_element_type=jnp.float32) + bv_ref[...]

    # Fold the 1/sqrt(C) softmax scale into q once (frees per-head VALU mults).
    q3 = (q * scale).reshape(G, T1, C).astype(md)
    k3 = k.reshape(G, T2, C).astype(md)
    v3 = v.reshape(G, T2, C).astype(md)

    lane_aligned_heads = (dh % 128 == 0)
    head_outs = []
    acc = None
    for h in range(num_heads):            # static unroll (num_heads small)
        lo = h * dh
        qh = q3[:, :, lo:lo + dh]         # (G, T1, dh)
        kh = k3[:, :, lo:lo + dh]         # (G, T2, dh)
        vh = v3[:, :, lo:lo + dh]         # (G, T2, dh)

        # scores: batch G, contract dh (no explicit transpose of kh).
        s = lax.dot_general(qh, kh, (((2,), (2,)), ((0,), (0,))),
                            preferred_element_type=jnp.float32)          # (G,T1,T2)

        # numerically-stable softmax in f32; reciprocal on the EUP.
        s = s - jnp.max(s, axis=-1, keepdims=True)
        p = jnp.exp(s)
        p = p * pl.reciprocal(jnp.sum(p, axis=-1, keepdims=True), approx=True)

        # P @ V: batch G, contract T2.
        oh = lax.dot_general(p.astype(md), vh, (((2,), (1,)), ((0,), (0,))),
                             preferred_element_type=jnp.float32)          # (G,T1,dh)

        if lane_aligned_heads:
            # Lane-aligned head chunk; defer the output projection.
            head_outs.append(oh.astype(md))
        else:
            # dh < 128: fold through the matching Wu row-slice, accumulate f32
            # (avoids a sub-lane-width concatenate / masked stores).
            yh = jnp.dot(oh.reshape(G * T1, dh).astype(md),
                         wu_ref[lo:lo + dh, :],
                         preferred_element_type=jnp.float32)              # (G*T1,C)
            acc = yh if acc is None else acc + yh

    if lane_aligned_heads:
        # One long-K (K=C) MXU matmul instead of num_heads short-K matmuls.
        o_all = jnp.concatenate(head_outs, axis=-1).reshape(G * T1, C)
        acc = jnp.dot(o_all, wu_ref[...], preferred_element_type=jnp.float32)

    y = acc + bu_ref[...]
    o_ref[...] = y.reshape(G, T1, C).astype(o_ref.dtype)


def mca_forward(x1, x2, params, num_heads, *,
                group_size=None, matmul_dtype=jnp.bfloat16, out_dtype=None):
    """Pallas implementation of MCA.forward (m2=None, eval mode)."""
    B1, T1, N1, C1 = x1.shape
    B2, T2, N2, C2 = x2.shape
    assert C1 == C2 and B1 * N1 == B2 * N2
    assert C1 % num_heads == 0
    if out_dtype is None:
        out_dtype = matmul_dtype

    BN = B1 * N1
    # (B, T, N, C) -> (B, N, T, C) -> (B*N, T, C); cast matmul operands once.
    x1f = jnp.transpose(x1, (0, 2, 1, 3)).reshape(BN, T1, C1).astype(matmul_dtype)
    x2f = jnp.transpose(x2, (0, 2, 1, 3)).reshape(BN, T2, C2).astype(matmul_dtype)

    # --- VMEM-budget-aware sizing (64 MiB v7x vs 128 MiB v5e/v6e). ---
    vmem_cap = _vmem_capacity_bytes()
    vmem_limit = int(min(vmem_cap * 7 // 8, vmem_cap - (4 << 20)))
    mm_bytes = jnp.dtype(matmul_dtype).itemsize
    out_bytes = jnp.dtype(out_dtype).itemsize
    if group_size is None:
        group_size = _derive_group_size(T1, T2, C1, mm_bytes, out_bytes,
                                        int(vmem_limit * 3 // 4))
    # Keep at least 2 grid steps so input/output DMAs overlap with compute.
    G = max(1, min(int(group_size), (BN + 1) // 2 if BN > 1 else 1))
    n_steps = pl.cdiv(BN, G)
    BN_pad = n_steps * G
    if BN_pad != BN:
        pad = BN_pad - BN
        x1f = jnp.pad(x1f, ((0, pad), (0, 0), (0, 0)))
        x2f = jnp.pad(x2f, ((0, pad), (0, 0), (0, 0)))

    scale = 1.0 / math.sqrt(C1)

    wq = params["wq"].astype(matmul_dtype); bq = params["bq"]
    wk = params["wk"].astype(matmul_dtype); bk = params["bk"]
    wv = params["wv"].astype(matmul_dtype); bv = params["bv"]
    wu = params["wu"].astype(matmul_dtype); bu = params["bu"]

    kernel = functools.partial(_mca_kernel, num_heads=num_heads,
                               scale=scale, matmul_dtype=matmul_dtype)

    # Last two block dims equal the full array dims -> tiling constraint OK.
    # NOTE: C < 128 (toy shapes) means masked partial stores on the output's
    # lane dim; acceptable for toy configs only.
    x1_spec = pl.BlockSpec((G, T1, C1), lambda i: (i, 0, 0))
    x2_spec = pl.BlockSpec((G, T2, C2), lambda i: (i, 0, 0))
    # Constant-index weights/biases: single-buffered (they never change
    # across grid steps; double-buffering wastes 4*C*C*2B of VMEM).
    w_spec = pl.BlockSpec((C1, C1), lambda i: (0, 0), pipeline_mode=pl.Buffered(1))
    b_spec = pl.BlockSpec((1, C1), lambda i: (0, 0), pipeline_mode=pl.Buffered(1))
    o_spec = pl.BlockSpec((G, T1, C1), lambda i: (i, 0, 0))

    out_flat = pl.pallas_call(
        kernel,
        out_shape=jax.ShapeDtypeStruct((BN_pad, T1, C1), out_dtype),
        grid_spec=pltpu.PrefetchScalarGridSpec(
            num_scalar_prefetch=0,
            grid=(n_steps,),
            in_specs=[x1_spec, x2_spec,
                      w_spec, b_spec, w_spec, b_spec,
                      w_spec, b_spec, w_spec, b_spec],
            out_specs=o_spec,
        ),
        compiler_params=pltpu.CompilerParams(
            dimension_semantics=("parallel",),
            vmem_limit_bytes=vmem_limit),
    )(x1f, x2f, wq, bq, wk, bk, wv, bv, wu, bu)

    out_flat = out_flat[:BN]
    # (B*N, T1, C) -> (B, N, T1, C) -> (B, T1, N, C)
    out = out_flat.reshape(B1, N1, T1, C1)
    out = jnp.transpose(out, (0, 2, 1, 3))
    return out


def mca_reference(x1, x2, params, num_heads):
    """Pure-JAX f32 reference mirroring the PyTorch forward (m2=None, eval)."""
    B1, T1, N1, C1 = x1.shape
    B2, T2, N2, C2 = x2.shape
    x1f = jnp.transpose(x1, (0, 2, 1, 3)).reshape(B1 * N1, T1, C1)
    x2f = jnp.transpose(x2, (0, 2, 1, 3)).reshape(B2 * N2, T2, C2)

    q = x1f @ params["wq"] + params["bq"]
    k = x2f @ params["wk"] + params["bk"]
    v = x2f @ params["wv"] + params["bv"]

    dh = C1 // num_heads
    q = q.reshape(B1 * N1, T1, num_heads, dh).transpose(0, 2, 1, 3)
    k = k.reshape(B2 * N2, T2, num_heads, dh).transpose(0, 2, 1, 3)
    v = v.reshape(B2 * N2, T2, num_heads, dh).transpose(0, 2, 1, 3)

    attn = jnp.einsum("bhtd,bhsd->bhts", q, k) / math.sqrt(C1)
    attn = jax.nn.softmax(attn, axis=-1)
    x = jnp.einsum("bhts,bhsd->bhtd", attn, v).transpose(0, 2, 1, 3)
    x = x.reshape(B1, N1, T1, C1).transpose(0, 2, 1, 3)
    x = x @ params["wu"] + params["bu"]
    return x


def init_params(key, embed_dim):
    """Deterministic init (PyTorch nn.Linear style uniform, stored as (in,out))."""
    bound = 1.0 / math.sqrt(embed_dim)
    keys = jax.random.split(key, 8)

    def lin(kw, kb):
        w = jax.random.uniform(kw, (embed_dim, embed_dim), jnp.float32, -bound, bound)
        b = jax.random.uniform(kb, (1, embed_dim), jnp.float32, -bound, bound)
        return w, b

    wq, bq = lin(keys[0], keys[1])
    wk, bk = lin(keys[2], keys[3])
    wv, bv = lin(keys[4], keys[5])
    wu, bu = lin(keys[6], keys[7])
    return dict(wq=wq, bq=bq, wk=wk, bk=bk, wv=wv, bv=bv, wu=wu, bu=bu)


if __name__ == "__main__":
    # --- Toy config (dh = 8 < 128 -> per-head Wu row-slice fold path). ---
    B, T1, T2, N, C = 2, 8, 8, 4, 32
    num_heads = 4

    key = jax.random.PRNGKey(0)
    k1, k2, kp = jax.random.split(key, 3)
    x1 = jax.random.normal(k1, (B, T1, N, C), jnp.float32)
    x2 = jax.random.normal(k2, (B, T2, N, C), jnp.float32)
    params = init_params(kp, C)

    ref = mca_reference(x1, x2, params, num_heads)

    # f32 matmul path, auto group size (n_steps >= 2): tight structural check.
    out_f32 = jax.block_until_ready(
        mca_forward(x1, x2, params, num_heads,
                    matmul_dtype=jnp.float32, out_dtype=jnp.float32))
    assert out_f32.shape == (B, T1, N, C)
    assert jnp.allclose(out_f32, ref, atol=2e-2, rtol=2e-2), "f32 mismatch vs reference"

    # bf16 matmul path, small explicit group size -> multi-step grid + BN padding.
    out_bf16 = jax.block_until_ready(
        mca_forward(x1, x2, params, num_heads,
                    group_size=3, matmul_dtype=jnp.bfloat16))
    assert out_bf16.shape == (B, T1, N, C)
    assert jnp.allclose(out_bf16.astype(jnp.float32), ref,
                        atol=8e-2, rtol=8e-2), "bf16 mismatch vs reference"

    # --- dh = 128 config: lane-aligned head concat + single (G*T,C)@(C,C) Wu. ---
    Bb, T1b, T2b, Nb, Cb, Hb = 1, 16, 8, 2, 256, 2
    kx1, kx2, kpb = jax.random.split(jax.random.PRNGKey(1), 3)
    x1b = jax.random.normal(kx1, (Bb, T1b, Nb, Cb), jnp.float32)
    x2b = jax.random.normal(kx2, (Bb, T2b, Nb, Cb), jnp.float32)
    pb = init_params(kpb, Cb)
    refb = mca_reference(x1b, x2b, pb, Hb)
    outb = jax.block_until_ready(
        mca_forward(x1b, x2b, pb, Hb,
                    matmul_dtype=jnp.float32, out_dtype=jnp.float32))
    assert outb.shape == (Bb, T1b, Nb, Cb)
    assert jnp.allclose(outb, refb, atol=2e-2, rtol=2e-2), "dh=128 path mismatch"

    print("KERNEL_OK")
</pallas_src>

<mosaic_0001>
module attributes {stable_mosaic.version = 11 : i64} {
  func.func @_mca_kernel(%arg0: i32, %arg1: memref<4x8x32xf32, #tpu.memory_space<vmem>>, %arg2: memref<4x8x32xf32, #tpu.memory_space<vmem>>, %arg3: memref<32x32xf32, #tpu.memory_space<vmem>>, %arg4: memref<1x32xf32, #tpu.memory_space<vmem>>, %arg5: memref<32x32xf32, #tpu.memory_space<vmem>>, %arg6: memref<1x32xf32, #tpu.memory_space<vmem>>, %arg7: memref<32x32xf32, #tpu.memory_space<vmem>>, %arg8: memref<1x32xf32, #tpu.memory_space<vmem>>, %arg9: memref<32x32xf32, #tpu.memory_space<vmem>>, %arg10: memref<1x32xf32, #tpu.memory_space<vmem>>, %arg11: memref<4x8x32xf32, #tpu.memory_space<vmem>>) attributes {dimension_semantics = [#tpu.dimension_semantics<parallel>], iteration_bounds = array<i64: 2>, scalar_prefetch = 0 : i64, scratch_operands = 0 : i64, tpu.core_type = #tpu.core_type<tc>, window_params = [{transform_indices = @transform_0, window_bounds = array<i64: 4, 8, 32>}, {transform_indices = @transform_1, window_bounds = array<i64: 4, 8, 32>}, {pipeline_mode = #tpu.pipeline_mode<synchronous>, transform_indices = @transform_2, window_bounds = array<i64: 32, 32>}, {pipeline_mode = #tpu.pipeline_mode<synchronous>, transform_indices = @transform_3, window_bounds = array<i64: 1, 32>}, {pipeline_mode = #tpu.pipeline_mode<synchronous>, transform_indices = @transform_4, window_bounds = array<i64: 32, 32>}, {pipeline_mode = #tpu.pipeline_mode<synchronous>, transform_indices = @transform_5, window_bounds = array<i64: 1, 32>}, {pipeline_mode = #tpu.pipeline_mode<synchronous>, transform_indices = @transform_6, window_bounds = array<i64: 32, 32>}, {pipeline_mode = #tpu.pipeline_mode<synchronous>, transform_indices = @transform_7, window_bounds = array<i64: 1, 32>}, {pipeline_mode = #tpu.pipeline_mode<synchronous>, transform_indices = @transform_8, window_bounds = array<i64: 32, 32>}, {pipeline_mode = #tpu.pipeline_mode<synchronous>, transform_indices = @transform_9, window_bounds = array<i64: 1, 32>}, {transform_indices = @transform_10, window_bounds = array<i64: 4, 8, 32>}]} {
    %c0 = arith.constant 0 : index
    %c0_0 = arith.constant 0 : index
    %c0_1 = arith.constant 0 : index
    %0 = vector.load %arg1[%c0, %c0_0, %c0_1] : memref<4x8x32xf32, #tpu.memory_space<vmem>>, vector<4x8x32xf32>
    %1 = vector.shape_cast %0 : vector<4x8x32xf32> to vector<32x32xf32>
    %c0_2 = arith.constant 0 : index
    %c0_3 = arith.constant 0 : index
    %c0_4 = arith.constant 0 : index
    %2 = vector.load %arg2[%c0_2, %c0_3, %c0_4] : memref<4x8x32xf32, #tpu.memory_space<vmem>>, vector<4x8x32xf32>
    %3 = vector.shape_cast %2 : vector<4x8x32xf32> to vector<32x32xf32>
    %c0_5 = arith.constant 0 : index
    %c0_6 = arith.constant 0 : index
    %4 = vector.load %arg3[%c0_5, %c0_6] : memref<32x32xf32, #tpu.memory_space<vmem>>, vector<32x32xf32>
    %cst = arith.constant dense<0.000000e+00> : vector<32x32xf32>
    %5 = tpu.matmul %1, %4, %cst {dimension_numbers = #tpu.dot_dimension_numbers<[1], [0], [0], [1], [0, 0, 1, 1], [], []>} : vector<32x32xf32>, vector<32x32xf32>, vector<32x32xf32> -> vector<32x32xf32>
    %c0_7 = arith.constant 0 : index
    %c0_8 = arith.constant 0 : index
    %6 = vector.load %arg4[%c0_7, %c0_8] : memref<1x32xf32, #tpu.memory_space<vmem>>, vector<1x32xf32>
    %7 = vector.broadcast %6 : vector<1x32xf32> to vector<32x32xf32>
    %8 = arith.addf %5, %7 : vector<32x32xf32>
    %c0_9 = arith.constant 0 : index
    %c0_10 = arith.constant 0 : index
    %9 = vector.load %arg5[%c0_9, %c0_10] : memref<32x32xf32, #tpu.memory_space<vmem>>, vector<32x32xf32>
    %cst_11 = arith.constant dense<0.000000e+00> : vector<32x32xf32>
    %10 = tpu.matmul %3, %9, %cst_11 {dimension_numbers = #tpu.dot_dimension_numbers<[1], [0], [0], [1], [0, 0, 1, 1], [], []>} : vector<32x32xf32>, vector<32x32xf32>, vector<32x32xf32> -> vector<32x32xf32>
    %c0_12 = arith.constant 0 : index
    %c0_13 = arith.constant 0 : index
    %11 = vector.load %arg6[%c0_12, %c0_13] : memref<1x32xf32, #tpu.memory_space<vmem>>, vector<1x32xf32>
    %12 = vector.broadcast %11 : vector<1x32xf32> to vector<32x32xf32>
    %13 = arith.addf %10, %12 : vector<32x32xf32>
    %c0_14 = arith.constant 0 : index
    %c0_15 = arith.constant 0 : index
    %14 = vector.load %arg7[%c0_14, %c0_15] : memref<32x32xf32, #tpu.memory_space<vmem>>, vector<32x32xf32>
    %cst_16 = arith.constant dense<0.000000e+00> : vector<32x32xf32>
    %15 = tpu.matmul %3, %14, %cst_16 {dimension_numbers = #tpu.dot_dimension_numbers<[1], [0], [0], [1], [0, 0, 1, 1], [], []>} : vector<32x32xf32>, vector<32x32xf32>, vector<32x32xf32> -> vector<32x32xf32>
    %c0_17 = arith.constant 0 : index
    %c0_18 = arith.constant 0 : index
    %16 = vector.load %arg8[%c0_17, %c0_18] : memref<1x32xf32, #tpu.memory_space<vmem>>, vector<1x32xf32>
    %17 = vector.broadcast %16 : vector<1x32xf32> to vector<32x32xf32>
    %18 = arith.addf %15, %17 : vector<32x32xf32>
    %cst_19 = arith.constant 0.176776692 : f32
    %19 = vector.broadcast %cst_19 : f32 to vector<32x32xf32>
    %20 = arith.mulf %8, %19 : vector<32x32xf32>
    %21 = vector.shape_cast %20 : vector<32x32xf32> to vector<4x8x32xf32>
    %22 = vector.shape_cast %13 : vector<32x32xf32> to vector<4x8x32xf32>
    %23 = vector.shape_cast %18 : vector<32x32xf32> to vector<4x8x32xf32>
    %24 = vector.extract_strided_slice %21 {offsets = [0, 0, 0], sizes = [4, 8, 8], strides = [1, 1, 1]} : vector<4x8x32xf32> to vector<4x8x8xf32>
    %25 = vector.extract_strided_slice %22 {offsets = [0, 0, 0], sizes = [4, 8, 8], strides = [1, 1, 1]} : vector<4x8x32xf32> to vector<4x8x8xf32>
    %26 = vector.extract_strided_slice %23 {offsets = [0, 0, 0], sizes = [4, 8, 8], strides = [1, 1, 1]} : vector<4x8x32xf32> to vector<4x8x8xf32>
    %cst_20 = arith.constant dense<0.000000e+00> : vector<4x8x8xf32>
    %27 = tpu.matmul %24, %25, %cst_20 {dimension_numbers = #tpu.dot_dimension_numbers<[2], [2], [1], [1], [0, 0, 0, 1, 1, 1], [0], [0]>} : vector<4x8x8xf32>, vector<4x8x8xf32>, vector<4x8x8xf32> -> vector<4x8x8xf32>
    %cst_21 = arith.constant dense<0xFF800000> : vector<4x8xf32>
    %28 = vector.multi_reduction <maximumf>, %27, %cst_21 [2] : vector<4x8x8xf32> to vector<4x8xf32>
    %29 = vector.shape_cast %28 : vector<4x8xf32> to vector<4x8x1xf32>
    %30 = vector.broadcast %29 : vector<4x8x1xf32> to vector<4x8x8xf32>
    %31 = arith.subf %27, %30 : vector<4x8x8xf32>
    %32 = math.exp %31 : vector<4x8x8xf32>
    %cst_22 = arith.constant dense<0.000000e+00> : vector<4x8xf32>
    %33 = vector.multi_reduction <add>, %32, %cst_22 [2] : vector<4x8x8xf32> to vector<4x8xf32>
    %34 = vector.shape_cast %33 : vector<4x8xf32> to vector<4x8x1xf32>
    %35 = tpu.reciprocal %34 {approx = true} : vector<4x8x1xf32> -> vector<4x8x1xf32>
    %36 = vector.broadcast %35 : vector<4x8x1xf32> to vector<4x8x8xf32>
    %37 = arith.mulf %32, %36 : vector<4x8x8xf32>
    %cst_23 = arith.constant dense<0.000000e+00> : vector<4x8x8xf32>
    %38 = tpu.matmul %37, %26, %cst_23 {dimension_numbers = #tpu.dot_dimension_numbers<[2], [1], [1], [2], [0, 0, 0, 1, 1, 2], [0], [0]>} : vector<4x8x8xf32>, vector<4x8x8xf32>, vector<4x8x8xf32> -> vector<4x8x8xf32>
    %39 = vector.shape_cast %38 : vector<4x8x8xf32> to vector<32x8xf32>
    %c0_24 = arith.constant 0 : index
    %c0_25 = arith.constant 0 : index
    %40 = vector.load %arg9[%c0_24, %c0_25] : memref<32x32xf32, #tpu.memory_space<vmem>>, vector<8x32xf32>
    %cst_26 = arith.constant dense<0.000000e+00> : vector<32x32xf32>
    %41 = tpu.matmul %39, %40, %cst_26 {dimension_numbers = #tpu.dot_dimension_numbers<[1], [0], [0], [1], [0, 0, 1, 1], [], []>} : vector<32x8xf32>, vector<8x32xf32>, vector<32x32xf32> -> vector<32x32xf32>
    %42 = vector.extract_strided_slice %21 {offsets = [0, 0, 8], sizes = [4, 8, 8], strides = [1, 1, 1]} : vector<4x8x32xf32> to vector<4x8x8xf32>
    %43 = vector.extract_strided_slice %22 {offsets = [0, 0, 8], sizes = [4, 8, 8], strides = [1, 1, 1]} : vector<4x8x32xf32> to vector<4x8x8xf32>
    %44 = vector.extract_strided_slice %23 {offsets = [0, 0, 8], sizes = [4, 8, 8], strides = [1, 1, 1]} : vector<4x8x32xf32> to vector<4x8x8xf32>
    %cst_27 = arith.constant dense<0.000000e+00> : vector<4x8x8xf32>
    %45 = tpu.matmul %42, %43, %cst_27 {dimension_numbers = #tpu.dot_dimension_numbers<[2], [2], [1], [1], [0, 0, 0, 1, 1, 1], [0], [0]>} : vector<4x8x8xf32>, vector<4x8x8xf32>, vector<4x8x8xf32> -> vector<4x8x8xf32>
    %cst_28 = arith.constant dense<0xFF800000> : vector<4x8xf32>
    %46 = vector.multi_reduction <maximumf>, %45, %cst_28 [2] : vector<4x8x8xf32> to vector<4x8xf32>
    %47 = vector.shape_cast %46 : vector<4x8xf32> to vector<4x8x1xf32>
    %48 = vector.broadcast %47 : vector<4x8x1xf32> to vector<4x8x8xf32>
    %49 = arith.subf %45, %48 : vector<4x8x8xf32>
    %50 = math.exp %49 : vector<4x8x8xf32>
    %cst_29 = arith.constant dense<0.000000e+00> : vector<4x8xf32>
    %51 = vector.multi_reduction <add>, %50, %cst_29 [2] : vector<4x8x8xf32> to vector<4x8xf32>
    %52 = vector.shape_cast %51 : vector<4x8xf32> to vector<4x8x1xf32>
    %53 = tpu.reciprocal %52 {approx = true} : vector<4x8x1xf32> -> vector<4x8x1xf32>
    %54 = vector.broadcast %53 : vector<4x8x1xf32> to vector<4x8x8xf32>
    %55 = arith.mulf %50, %54 : vector<4x8x8xf32>
    %cst_30 = arith.constant dense<0.000000e+00> : vector<4x8x8xf32>
    %56 = tpu.matmul %55, %44, %cst_30 {dimension_numbers = #tpu.dot_dimension_numbers<[2], [1], [1], [2], [0, 0, 0, 1, 1, 2], [0], [0]>} : vector<4x8x8xf32>, vector<4x8x8xf32>, vector<4x8x8xf32> -> vector<4x8x8xf32>
    %57 = vector.shape_cast %56 : vector<4x8x8xf32> to vector<32x8xf32>
    %c8 = arith.constant 8 : index
    %c0_31 = arith.constant 0 : index
    %58 = vector.load %arg9[%c8, %c0_31] : memref<32x32xf32, #tpu.memory_space<vmem>>, vector<8x32xf32>
    %cst_32 = arith.constant dense<0.000000e+00> : vector<32x32xf32>
    %59 = tpu.matmul %57, %58, %cst_32 {dimension_numbers = #tpu.dot_dimension_numbers<[1], [0], [0], [1], [0, 0, 1, 1], [], []>} : vector<32x8xf32>, vector<8x32xf32>, vector<32x32xf32> -> vector<32x32xf32>
    %60 = arith.addf %41, %59 : vector<32x32xf32>
    %61 = vector.extract_strided_slice %21 {offsets = [0, 0, 16], sizes = [4, 8, 8], strides = [1, 1, 1]} : vector<4x8x32xf32> to vector<4x8x8xf32>
    %62 = vector.extract_strided_slice %22 {offsets = [0, 0, 16], sizes = [4, 8, 8], strides = [1, 1, 1]} : vector<4x8x32xf32> to vector<4x8x8xf32>
    %63 = vector.extract_strided_slice %23 {offsets = [0, 0, 16], sizes = [4, 8, 8], strides = [1, 1, 1]} : vector<4x8x32xf32> to vector<4x8x8xf32>
    %cst_33 = arith.constant dense<0.000000e+00> : vector<4x8x8xf32>
    %64 = tpu.matmul %61, %62, %cst_33 {dimension_numbers = #tpu.dot_dimension_numbers<[2], [2], [1], [1], [0, 0, 0, 1, 1, 1], [0], [0]>} : vector<4x8x8xf32>, vector<4x8x8xf32>, vector<4x8x8xf32> -> vector<4x8x8xf32>
    %cst_34 = arith.constant dense<0xFF800000> : vector<4x8xf32>
    %65 = vector.multi_reduction <maximumf>, %64, %cst_34 [2] : vector<4x8x8xf32> to vector<4x8xf32>
    %66 = vector.shape_cast %65 : vector<4x8xf32> to vector<4x8x1xf32>
    %67 = vector.broadcast %66 : vector<4x8x1xf32> to vector<4x8x8xf32>
    %68 = arith.subf %64, %67 : vector<4x8x8xf32>
    %69 = math.exp %68 : vector<4x8x8xf32>
    %cst_35 = arith.constant dense<0.000000e+00> : vector<4x8xf32>
    %70 = vector.multi_reduction <add>, %69, %cst_35 [2] : vector<4x8x8xf32> to vector<4x8xf32>
    %71 = vector.shape_cast %70 : vector<4x8xf32> to vector<4x8x1xf32>
    %72 = tpu.reciprocal %71 {approx = true} : vector<4x8x1xf32> -> vector<4x8x1xf32>
    %73 = vector.broadcast %72 : vector<4x8x1xf32> to vector<4x8x8xf32>
    %74 = arith.mulf %69, %73 : vector<4x8x8xf32>
    %cst_36 = arith.constant dense<0.000000e+00> : vector<4x8x8xf32>
    %75 = tpu.matmul %74, %63, %cst_36 {dimension_numbers = #tpu.dot_dimension_numbers<[2], [1], [1], [2], [0, 0, 0, 1, 1, 2], [0], [0]>} : vector<4x8x8xf32>, vector<4x8x8xf32>, vector<4x8x8xf32> -> vector<4x8x8xf32>
    %76 = vector.shape_cast %75 : vector<4x8x8xf32> to vector<32x8xf32>
    %c16 = arith.constant 16 : index
    %c0_37 = arith.constant 0 : index
    %77 = vector.load %arg9[%c16, %c0_37] : memref<32x32xf32, #tpu.memory_space<vmem>>, vector<8x32xf32>
    %cst_38 = arith.constant dense<0.000000e+00> : vector<32x32xf32>
    %78 = tpu.matmul %76, %77, %cst_38 {dimension_numbers = #tpu.dot_dimension_numbers<[1], [0], [0], [1], [0, 0, 1, 1], [], []>} : vector<32x8xf32>, vector<8x32xf32>, vector<32x32xf32> -> vector<32x32xf32>
    %79 = arith.addf %60, %78 : vector<32x32xf32>
    %80 = vector.extract_strided_slice %21 {offsets = [0, 0, 24], sizes = [4, 8, 8], strides = [1, 1, 1]} : vector<4x8x32xf32> to vector<4x8x8xf32>
    %81 = vector.extract_strided_slice %22 {offsets = [0, 0, 24], sizes = [4, 8, 8], strides = [1, 1, 1]} : vector<4x8x32xf32> to vector<4x8x8xf32>
    %82 = vector.extract_strided_slice %23 {offsets = [0, 0, 24], sizes = [4, 8, 8], strides = [1, 1, 1]} : vector<4x8x32xf32> to vector<4x8x8xf32>
    %cst_39 = arith.constant dense<0.000000e+00> : vector<4x8x8xf32>
    %83 = tpu.matmul %80, %81, %cst_39 {dimension_numbers = #tpu.dot_dimension_numbers<[2], [2], [1], [1], [0, 0, 0, 1, 1, 1], [0], [0]>} : vector<4x8x8xf32>, vector<4x8x8xf32>, vector<4x8x8xf32> -> vector<4x8x8xf32>
    %cst_40 = arith.constant dense<0xFF800000> : vector<4x8xf32>
    %84 = vector.multi_reduction <maximumf>, %83, %cst_40 [2] : vector<4x8x8xf32> to vector<4x8xf32>
    %85 = vector.shape_cast %84 : vector<4x8xf32> to vector<4x8x1xf32>
    %86 = vector.broadcast %85 : vector<4x8x1xf32> to vector<4x8x8xf32>
    %87 = arith.subf %83, %86 : vector<4x8x8xf32>
    %88 = math.exp %87 : vector<4x8x8xf32>
    %cst_41 = arith.constant dense<0.000000e+00> : vector<4x8xf32>
    %89 = vector.multi_reduction <add>, %88, %cst_41 [2] : vector<4x8x8xf32> to vector<4x8xf32>
    %90 = vector.shape_cast %89 : vector<4x8xf32> to vector<4x8x1xf32>
    %91 = tpu.reciprocal %90 {approx = true} : vector<4x8x1xf32> -> vector<4x8x1xf32>
    %92 = vector.broadcast %91 : vector<4x8x1xf32> to vector<4x8x8xf32>
    %93 = arith.mulf %88, %92 : vector<4x8x8xf32>
    %cst_42 = arith.constant dense<0.000000e+00> : vector<4x8x8xf32>
    %94 = tpu.matmul %93, %82, %cst_42 {dimension_numbers = #tpu.dot_dimension_numbers<[2], [1], [1], [2], [0, 0, 0, 1, 1, 2], [0], [0]>} : vector<4x8x8xf32>, vector<4x8x8xf32>, vector<4x8x8xf32> -> vector<4x8x8xf32>
    %95 = vector.shape_cast %94 : vector<4x8x8xf32> to vector<32x8xf32>
    %c24 = arith.constant 24 : index
    %c0_43 = arith.constant 0 : index
    %96 = vector.load %arg9[%c24, %c0_43] : memref<32x32xf32, #tpu.memory_space<vmem>>, vector<8x32xf32>
    %cst_44 = arith.constant dense<0.000000e+00> : vector<32x32xf32>
    %97 = tpu.matmul %95, %96, %cst_44 {dimension_numbers = #tpu.dot_dimension_numbers<[1], [0], [0], [1], [0, 0, 1, 1], [], []>} : vector<32x8xf32>, vector<8x32xf32>, vector<32x32xf32> -> vector<32x32xf32>
    %98 = arith.addf %79, %97 : vector<32x32xf32>
    %c0_45 = arith.constant 0 : index
    %c0_46 = arith.constant 0 : index
    %99 = vector.load %arg10[%c0_45, %c0_46] : memref<1x32xf32, #tpu.memory_space<vmem>>, vector<1x32xf32>
    %100 = vector.broadcast %99 : vector<1x32xf32> to vector<32x32xf32>
    %101 = arith.addf %98, %100 : vector<32x32xf32>
    %102 = vector.shape_cast %101 : vector<32x32xf32> to vector<4x8x32xf32>
    %c0_47 = arith.constant 0 : index
    %c0_48 = arith.constant 0 : index
    %c0_49 = arith.constant 0 : index
    %103 = vector.load %arg11[%c0_47, %c0_48, %c0_49] : memref<4x8x32xf32, #tpu.memory_space<vmem>>, vector<4x8x32xf32>
    tpu.vector_store %arg11[%c0_47, %c0_48, %c0_49], %102 {strides = array<i32>} : memref<4x8x32xf32, #tpu.memory_space<vmem>>, vector<4x8x32xf32>,
    return
  }
  func.func @transform_0(%arg0: i32) -> (i32, i32, i32) {
    %c0_i32 = arith.constant 0 : i32
    %c0_i32_0 = arith.constant 0 : i32
    %c0_i32_1 = arith.constant 0 : i32
    return %arg0, %c0_i32, %c0_i32_0 : i32, i32, i32
  }
  func.func @transform_1(%arg0: i32) -> (i32, i32, i32) {
    %c0_i32 = arith.constant 0 : i32
    %c0_i32_0 = arith.constant 0 : i32
    %c0_i32_1 = arith.constant 0 : i32
    return %arg0, %c0_i32, %c0_i32_0 : i32, i32, i32
  }
  func.func @transform_2(%arg0: i32) -> (i32, i32) {
    %c0_i32 = arith.constant 0 : i32
    %c0_i32_0 = arith.constant 0 : i32
    %c0_i32_1 = arith.constant 0 : i32
    return %c0_i32, %c0_i32_0 : i32, i32
  }
  func.func @transform_3(%arg0: i32) -> (i32, i32) {
    %c0_i32 = arith.constant 0 : i32
    %c0_i32_0 = arith.constant 0 : i32
    %c0_i32_1 = arith.constant 0 : i32
    return %c0_i32, %c0_i32_0 : i32, i32
  }
  func.func @transform_4(%arg0: i32) -> (i32, i32) {
    %c0_i32 = arith.constant 0 : i32
    %c0_i32_0 = arith.constant 0 : i32
    %c0_i32_1 = arith.constant 0 : i32
    return %c0_i32, %c0_i32_0 : i32, i32
  }
  func.func @transform_5(%arg0: i32) -> (i32, i32) {
    %c0_i32 = arith.constant 0 : i32
    %c0_i32_0 = arith.constant 0 : i32
    %c0_i32_1 = arith.constant 0 : i32
    return %c0_i32, %c0_i32_0 : i32, i32
  }
  func.func @transform_6(%arg0: i32) -> (i32, i32) {
    %c0_i32 = arith.constant 0 : i32
    %c0_i32_0 = arith.constant 0 : i32
    %c0_i32_1 = arith.constant 0 : i32
    return %c0_i32, %c0_i32_0 : i32, i32
  }
  func.func @transform_7(%arg0: i32) -> (i32, i32) {
    %c0_i32 = arith.constant 0 : i32
    %c0_i32_0 = arith.constant 0 : i32
    %c0_i32_1 = arith.constant 0 : i32
    return %c0_i32, %c0_i32_0 : i32, i32
  }
  func.func @transform_8(%arg0: i32) -> (i32, i32) {
    %c0_i32 = arith.constant 0 : i32
    %c0_i32_0 = arith.constant 0 : i32
    %c0_i32_1 = arith.constant 0 : i32
    return %c0_i32, %c0_i32_0 : i32, i32
  }
  func.func @transform_9(%arg0: i32) -> (i32, i32) {
    %c0_i32 = arith.constant 0 : i32
    %c0_i32_0 = arith.constant 0 : i32
    %c0_i32_1 = arith.constant 0 : i32
    return %c0_i32, %c0_i32_0 : i32, i32
  }
  func.func @transform_10(%arg0: i32) -> (i32, i32, i32) {
    %c0_i32 = arith.constant 0 : i32
    %c0_i32_0 = arith.constant 0 : i32
    %c0_i32_1 = arith.constant 0 : i32
    return %arg0, %c0_i32, %c0_i32_0 : i32, i32, i32
  }
}

</mosaic_0001>

<llo_original>
// kernel: tpu_custom_call.1
$region0: #{tpu_custom_call.1}
  #allocation0 [shape = 'u32[]', space=smem, size = 0x4, offset = 0x4, fixed_abs, tag = 'smem constant byte address 0x4 - core index']
  #allocation1 [shape = 'u32[72,128]{1,0:T(1,128)}', space=vmem, size = 0x9000, scoped, tag = 'internal scratch']
  %s0 = inlined_call_operand.hbm [shape: f32[8,8,32], index: 0, kind: input, shape index: {}]
  %s1 = inlined_call_operand.hbm [shape: f32[8,8,32], index: 1, kind: input, shape index: {}]
  %s2 = inlined_call_operand.hbm [shape: f32[32,32], index: 2, kind: input, shape index: {}]
  %s3 = inlined_call_operand.vmem [shape: f32[1,32], index: 3, kind: input, shape index: {}]
  %s4 = inlined_call_operand.hbm [shape: f32[32,32], index: 4, kind: input, shape index: {}]
  %s5 = inlined_call_operand.vmem [shape: f32[1,32], index: 5, kind: input, shape index: {}]
  %s6 = inlined_call_operand.hbm [shape: f32[32,32], index: 6, kind: input, shape index: {}]
  %s7 = inlined_call_operand.vmem [shape: f32[1,32], index: 7, kind: input, shape index: {}]
  %s8 = inlined_call_operand.hbm [shape: f32[32,32], index: 8, kind: input, shape index: {}]
  %s9 = inlined_call_operand.vmem [shape: f32[1,32], index: 9, kind: input, shape index: {}]
  %s10 = inlined_call_operand.hbm [shape: f32[8,8,32], index: 10, kind: output, shape index: {}]
  %s11 = sld [smem:[#allocation0]]
  $region97: #{tpu_custom_call.1} parent=0
    _
  %s13 = ssub.s32 1, %s11
  %s14 = scalar_select 0, %s13, %s11
  $region1: #{tpu_custom_call.1} parent=0
    #allocation2 [shape = 'u8[32768]{0}', space=vmem, size = 0x8000, scoped, tag = 'input window, operand 0']
    #allocation3 [shape = 's32[2]{0}', space=sflag, size = 0x8, scoped, tag = 'scoped memory for tpu_custom_call.1']
    #allocation4 [shape = 's32[2]{0}', space=sflag, size = 0x8, scoped, tag = 'scoped memory for tpu_custom_call.1']
    #allocation5 [shape = 'u8[32768]{0}', space=vmem, size = 0x8000, scoped, tag = 'input window, operand 1']
    #allocation6 [shape = 's32[2]{0}', space=sflag, size = 0x8, scoped, tag = 'scoped memory for tpu_custom_call.1']
    #allocation7 [shape = 'u8[16384]{0}', space=vmem, size = 0x4000, scoped, tag = 'input window, operand 2, single buffered']
    #allocation8 [shape = 'u8[16384]{0}', space=vmem, size = 0x4000, scoped, tag = 'input window, operand 4, single buffered']
    #allocation9 [shape = 's32[1]{0}', space=sflag, size = 0x4, scoped, tag = 'scoped memory for tpu_custom_call.1']
    #allocation10 [shape = 'u8[16384]{0}', space=vmem, size = 0x4000, scoped, tag = 'input window, operand 6, single buffered']
    #allocation11 [shape = 'u8[16384]{0}', space=vmem, size = 0x4000, scoped, tag = 'input window, operand 8, single buffered']
    #allocation12 [shape = 's32[1]{0}', space=sflag, size = 0x4, scoped, tag = 'scoped memory for tpu_custom_call.1']
    #allocation13 [shape = 'u8[32768]{0}', space=vmem, size = 0x8000, scoped, tag = 'output window, operand 0']
    %15 = vsyncpa [#allocation3], 0
    %s16 = scalar_lea.sflag [#allocation3], 1
    %17 = vsyncpa %s16, 0
    %18 = vsyncpa [#allocation6], 0
    %s19 = scalar_lea.sflag [#allocation6], 1
    %20 = vsyncpa %s19, 0
    %21 = vsyncpa [#allocation9], 0
    %22 = vsyncpa [#allocation12], 0
    %23 = vsyncpa [#allocation4], 0
    %s24 = scalar_lea.sflag [#allocation4], 1
    %25 = vsyncpa %s24, 0
    loop: start=0, step=1, limit=4
    $region2: #{tpu_custom_call.1} parent=1 // loop_pre_header
      _
    $region3: #{tpu_custom_call.1} parent=1 // loop_header
      %s27 = sphi 0, %s31
      %p28 = scmp.ge.s32.totalorder %s27, 4
      %s37 = sphi 0, %s39
      %s40 = sphi 0, %s37
      %s41 = sphi 0, %s40
      %s57 = sphi 0, %s41
      %s63 = sphi 0, %s65
      %s66 = sphi 0, %s63
      %s67 = sphi 0, %s66
      %s83 = sphi 0, %s67
      %s87 = sphi 0, %s87
      %s89 = sphi 0, %s87
      %s90 = sphi 0, %s89
      %s104 = sphi 0, %s90
      %s108 = sphi 0, %s108
      %s110 = sphi 0, %s108
      %s111 = sphi 0, %s110
      %s125 = sphi 0, %s111
      %s129 = sphi 0, %s129
      %s131 = sphi 0, %s129
      %s132 = sphi 0, %s131
      %s146 = sphi 0, %s132
      %s150 = sphi 0, %s150
      %s152 = sphi 0, %s150
      %s153 = sphi 0, %s152
      %s167 = sphi 0, %s153
      %s171 = sphi 0, %s171
      %s173 = sphi 0, %s171
      %s174 = sphi 0, %s173
      %s188 = sphi 0, %s174
      %s192 = sphi 0, %s192
      %s194 = sphi 0, %s192
      %s195 = sphi 0, %s194
      %s209 = sphi 0, %s195
      %s213 = sphi 0, %s213
      %s215 = sphi 0, %s213
      %s216 = sphi 0, %s215
      %s230 = sphi 0, %s216
      %s234 = sphi 0, %s234
      %s236 = sphi 0, %s234
      %s237 = sphi 0, %s236
      %s251 = sphi 0, %s237
      %s257 = sphi 0, %s259
      %s260 = sphi 0, %s257
      %s261 = sphi 0, %s260
      %s277 = sphi 0, %s261
    $region4: #{tpu_custom_call.1} parent=1 // loop_header_branch
      %30 = sbr.rel (%p28) target = $region8
    $region5: #{tpu_custom_call.1} parent=1 // loop_body
      %s32 = ssub.s32 %s27, 1
      %s33 = ssub.s32 %s27, 2
      %s34 = sadd.s32 %s27, 1
      %s35 = ssub.s32 %s27, %s34
      %p36 = scmp.eq.s32.totalorder %s35, 0
      %s38 = sadd.s32 %s37, 1
      %s39 = scalar_select %p36, %s37, %s38
      %p42 = pneg %p36
      %p43 = scmp.eq.s32.totalorder %s27, 1
      %p44 = por %p42, %p43
      %p45 = scmp.ne.s32.totalorder %s37, %s40
      %p46 = scmp.eq.s32.totalorder %s27, 0
      %p47 = por %p45, %p46
      %p48 = scmp.ne.s32.totalorder %s37, %s40
      %p49 = scmp.eq.s32.totalorder %s32, 1
      %p50 = por %p48, %p49
      %p51 = scmp.ne.s32.totalorder %s40, %s41
      %p52 = scmp.eq.s32.totalorder %s32, 0
      %p53 = por %p51, %p52
      %p54 = scmp.ne.s32.totalorder %s40, %s41
      %p55 = scmp.eq.s32.totalorder %s33, 1
      %p56 = por %p54, %p55
      %p58 = scmp.ne.s32.totalorder %s41, %s57
      %p59 = scmp.eq.s32.totalorder %s33, 0
      %p60 = por %p58, %p59
      %s61 = ssub.s32 %s27, %s34
      %p62 = scmp.eq.s32.totalorder %s61, 0
      %s64 = sadd.s32 %s63, 1
      %s65 = scalar_select %p62, %s63, %s64
      %p68 = pneg %p62
      %p69 = scmp.eq.s32.totalorder %s27, 1
      %p70 = por %p68, %p69
      %p71 = scmp.ne.s32.totalorder %s63, %s66
      %p72 = scmp.eq.s32.totalorder %s27, 0
      %p73 = por %p71, %p72
      %p74 = scmp.ne.s32.totalorder %s63, %s66
      %p75 = scmp.eq.s32.totalorder %s32, 1
      %p76 = por %p74, %p75
      %p77 = scmp.ne.s32.totalorder %s66, %s67
      %p78 = scmp.eq.s32.totalorder %s32, 0
      %p79 = por %p77, %p78
      %p80 = scmp.ne.s32.totalorder %s66, %s67
      %p81 = scmp.eq.s32.totalorder %s33, 1
      %p82 = por %p80, %p81
      %p84 = scmp.ne.s32.totalorder %s67, %s83
      %p85 = scmp.eq.s32.totalorder %s33, 0
      %p86 = por %p84, %p85
      %s88 = sadd.s32 %s87, 1
      %p91 = scmp.eq.s32.totalorder %s27, 1
      %p92 = scmp.ne.s32.totalorder %s87, %s89
      %p93 = scmp.eq.s32.totalorder %s27, 0
      %p94 = por %p92, %p93
      %p95 = scmp.ne.s32.totalorder %s87, %s89
      %p96 = scmp.eq.s32.totalorder %s32, 1
      %p97 = por %p95, %p96
      %p98 = scmp.ne.s32.totalorder %s89, %s90
      %p99 = scmp.eq.s32.totalorder %s32, 0
      %p100 = por %p98, %p99
      %p101 = scmp.ne.s32.totalorder %s89, %s90
      %p102 = scmp.eq.s32.totalorder %s33, 1
      %p103 = por %p101, %p102
      %p105 = scmp.ne.s32.totalorder %s90, %s104
      %p106 = scmp.eq.s32.totalorder %s33, 0
      %p107 = por %p105, %p106
      %s109 = sadd.s32 %s108, 1
      %p112 = scmp.eq.s32.totalorder %s27, 1
      %p113 = scmp.ne.s32.totalorder %s108, %s110
      %p114 = scmp.eq.s32.totalorder %s27, 0
      %p115 = por %p113, %p114
      %p116 = scmp.ne.s32.totalorder %s108, %s110
      %p117 = scmp.eq.s32.totalorder %s32, 1
      %p118 = por %p116, %p117
      %p119 = scmp.ne.s32.totalorder %s110, %s111
      %p120 = scmp.eq.s32.totalorder %s32, 0
      %p121 = por %p119, %p120
      %p122 = scmp.ne.s32.totalorder %s110, %s111
      %p123 = scmp.eq.s32.totalorder %s33, 1
      %p124 = por %p122, %p123
      %p126 = scmp.ne.s32.totalorder %s111, %s125
      %p127 = scmp.eq.s32.totalorder %s33, 0
      %p128 = por %p126, %p127
      %s130 = sadd.s32 %s129, 1
      %p133 = scmp.eq.s32.totalorder %s27, 1
      %p134 = scmp.ne.s32.totalorder %s129, %s131
      %p135 = scmp.eq.s32.totalorder %s27, 0
      %p136 = por %p134, %p135
      %p137 = scmp.ne.s32.totalorder %s129, %s131
      %p138 = scmp.eq.s32.totalorder %s32, 1
      %p139 = por %p137, %p138
      %p140 = scmp.ne.s32.totalorder %s131, %s132
      %p141 = scmp.eq.s32.totalorder %s32, 0
      %p142 = por %p140, %p141
      %p143 = scmp.ne.s32.totalorder %s131, %s132
      %p144 = scmp.eq.s32.totalorder %s33, 1
      %p145 = por %p143, %p144
      %p147 = scmp.ne.s32.totalorder %s132, %s146
      %p148 = scmp.eq.s32.totalorder %s33, 0
      %p149 = por %p147, %p148
      %s151 = sadd.s32 %s150, 1
      %p154 = scmp.eq.s32.totalorder %s27, 1
      %p155 = scmp.ne.s32.totalorder %s150, %s152
      %p156 = scmp.eq.s32.totalorder %s27, 0
      %p157 = por %p155, %p156
      %p158 = scmp.ne.s32.totalorder %s150, %s152
      %p159 = scmp.eq.s32.totalorder %s32, 1
      %p160 = por %p158, %p159
      %p161 = scmp.ne.s32.totalorder %s152, %s153
      %p162 = scmp.eq.s32.totalorder %s32, 0
      %p163 = por %p161, %p162
      %p164 = scmp.ne.s32.totalorder %s152, %s153
      %p165 = scmp.eq.s32.totalorder %s33, 1
      %p166 = por %p164, %p165
      %p168 = scmp.ne.s32.totalorder %s153, %s167
      %p169 = scmp.eq.s32.totalorder %s33, 0
      %p170 = por %p168, %p169
      %s172 = sadd.s32 %s171, 1
      %p175 = scmp.eq.s32.totalorder %s27, 1
      %p176 = scmp.ne.s32.totalorder %s171, %s173
      %p177 = scmp.eq.s32.totalorder %s27, 0
      %p178 = por %p176, %p177
      %p179 = scmp.ne.s32.totalorder %s171, %s173
      %p180 = scmp.eq.s32.totalorder %s32, 1
      %p181 = por %p179, %p180
      %p182 = scmp.ne.s32.totalorder %s173, %s174
      %p183 = scmp.eq.s32.totalorder %s32, 0
      %p184 = por %p182, %p183
      %p185 = scmp.ne.s32.totalorder %s173, %s174
      %p186 = scmp.eq.s32.totalorder %s33, 1
      %p187 = por %p185, %p186
      %p189 = scmp.ne.s32.totalorder %s174, %s188
      %p190 = scmp.eq.s32.totalorder %s33, 0
      %p191 = por %p189, %p190
      %s193 = sadd.s32 %s192, 1
      %p196 = scmp.eq.s32.totalorder %s27, 1
      %p197 = scmp.ne.s32.totalorder %s192, %s194
      %p198 = scmp.eq.s32.totalorder %s27, 0
      %p199 = por %p197, %p198
      %p200 = scmp.ne.s32.totalorder %s192, %s194
      %p201 = scmp.eq.s32.totalorder %s32, 1
      %p202 = por %p200, %p201
      %p203 = scmp.ne.s32.totalorder %s194, %s195
      %p204 = scmp.eq.s32.totalorder %s32, 0
      %p205 = por %p203, %p204
      %p206 = scmp.ne.s32.totalorder %s194, %s195
      %p207 = scmp.eq.s32.totalorder %s33, 1
      %p208 = por %p206, %p207
      %p210 = scmp.ne.s32.totalorder %s195, %s209
      %p211 = scmp.eq.s32.totalorder %s33, 0
      %p212 = por %p210, %p211
      %s214 = sadd.s32 %s213, 1
      %p217 = scmp.eq.s32.totalorder %s27, 1
      %p218 = scmp.ne.s32.totalorder %s213, %s215
      %p219 = scmp.eq.s32.totalorder %s27, 0
      %p220 = por %p218, %p219
      %p221 = scmp.ne.s32.totalorder %s213, %s215
      %p222 = scmp.eq.s32.totalorder %s32, 1
      %p223 = por %p221, %p222
      %p224 = scmp.ne.s32.totalorder %s215, %s216
      %p225 = scmp.eq.s32.totalorder %s32, 0
      %p226 = por %p224, %p225
      %p227 = scmp.ne.s32.totalorder %s215, %s216
      %p228 = scmp.eq.s32.totalorder %s33, 1
      %p229 = por %p227, %p228
      %p231 = scmp.ne.s32.totalorder %s216, %s230
      %p232 = scmp.eq.s32.totalorder %s33, 0
      %p233 = por %p231, %p232
      %s235 = sadd.s32 %s234, 1
      %p238 = scmp.eq.s32.totalorder %s27, 1
      %p239 = scmp.ne.s32.totalorder %s234, %s236
      %p240 = scmp.eq.s32.totalorder %s27, 0
      %p241 = por %p239, %p240
      %p242 = scmp.ne.s32.totalorder %s234, %s236
      %p243 = scmp.eq.s32.totalorder %s32, 1
      %p244 = por %p242, %p243
      %p245 = scmp.ne.s32.totalorder %s236, %s237
      %p246 = scmp.eq.s32.totalorder %s32, 0
      %p247 = por %p245, %p246
      %p248 = scmp.ne.s32.totalorder %s236, %s237
      %p249 = scmp.eq.s32.totalorder %s33, 1
      %p250 = por %p248, %p249
      %p252 = scmp.ne.s32.totalorder %s237, %s251
      %p253 = scmp.eq.s32.totalorder %s33, 0
      %p254 = por %p252, %p253
      %s255 = ssub.s32 %s27, %s34
      %p256 = scmp.eq.s32.totalorder %s255, 0
      %s258 = sadd.s32 %s257, 1
      %s259 = scalar_select %p256, %s257, %s258
      %p262 = pneg %p256
      %p263 = scmp.eq.s32.totalorder %s27, 1
      %p264 = por %p262, %p263
      %p265 = scmp.ne.s32.totalorder %s257, %s260
      %p266 = scmp.eq.s32.totalorder %s27, 0
      %p267 = por %p265, %p266
      %p268 = scmp.ne.s32.totalorder %s257, %s260
      %p269 = scmp.eq.s32.totalorder %s32, 1
      %p270 = por %p268, %p269
      %p271 = scmp.ne.s32.totalorder %s260, %s261
      %p272 = scmp.eq.s32.totalorder %s32, 0
      %p273 = por %p271, %p272
      %p274 = scmp.ne.s32.totalorder %s260, %s261
      %p275 = scmp.eq.s32.totalorder %s33, 1
      %p276 = por %p274, %p275
      %p278 = scmp.ne.s32.totalorder %s261, %s277
      %p279 = scmp.eq.s32.totalorder %s33, 0
      %p280 = por %p278, %p279
      %p281 = scmp.le.s32.totalorder 1, %s27
      %p282 = scmp.lt.s32.totalorder %s27, 3
      %p283 = pnand %p281, %p282
      %p284 = pneg %p283
      // Predicated region
      $region9: #{tpu_custom_call.1} parent=5 // pred_check
        _
      $region10: #{tpu_custom_call.1} parent=5 // pred_check_branch
        %286 = sbr.rel (%p283) target = $region12
      $region11: #{tpu_custom_call.1} parent=5 // pred_region
        %s287 = ssub.s32 %s27, 1
        // Predicated region
        $region13: #{tpu_custom_call.1} parent=11 // pred_check
          %p288 = pneg %p100
        $region14: #{tpu_custom_call.1} parent=11 // pred_check_branch
          %290 = sbr.rel (%p288) target = $region16
        $region15: #{tpu_custom_call.1} parent=11 // pred_region
          %292 = vsyncadd [#allocation6], 0
          %s293 = sshll.u32 %s2, 4
          %s294 = int_to_ptr.hbm [resolvable:$true] %s293
          %s295 = sshll.u32 [#allocation7], 4
          %s296 = int_to_ptr.vmem [resolvable:$true] %s295
          %301 = dma.hbm_to_vmem [thread:$0]  %s294, 512, %s296, [#allocation6], 128, 128, 8
        $region16: #{tpu_custom_call.1} parent=11 // pred_fallthru
          _
        // Predicated region
        $region17: #{tpu_custom_call.1} parent=11 // pred_check
          %p302 = pneg %p121
        $region18: #{tpu_custom_call.1} parent=11 // pred_check_branch
          %304 = sbr.rel (%p302) target = $region20
        $region19: #{tpu_custom_call.1} parent=11 // pred_region
          _
        $region20: #{tpu_custom_call.1} parent=11 // pred_fallthru
          _
        // Predicated region
        $region21: #{tpu_custom_call.1} parent=11 // pred_check
          %p305 = pneg %p142
        $region22: #{tpu_custom_call.1} parent=11 // pred_check_branch
          %307 = sbr.rel (%p305) target = $region24
        $region23: #{tpu_custom_call.1} parent=11 // pred_region
          %309 = vsyncadd [#allocation9], 0
          %s310 = sshll.u32 %s4, 4
          %s311 = int_to_ptr.hbm [resolvable:$true] %s310
          %s312 = sshll.u32 [#allocation8], 4
          %s313 = int_to_ptr.vmem [resolvable:$true] %s312
          %318 = dma.hbm_to_vmem [thread:$0]  %s311, 512, %s313, [#allocation9], 128, 128, 8
        $region24: #{tpu_custom_call.1} parent=11 // pred_fallthru
          _
        // Predicated region
        $region25: #{tpu_custom_call.1} parent=11 // pred_check
          %p319 = pneg %p163
        $region26: #{tpu_custom_call.1} parent=11 // pred_check_branch
          %321 = sbr.rel (%p319) target = $region28
        $region27: #{tpu_custom_call.1} parent=11 // pred_region
          _
        $region28: #{tpu_custom_call.1} parent=11 // pred_fallthru
          _
        // Predicated region
        $region29: #{tpu_custom_call.1} parent=11 // pred_check
          %p322 = pneg %p184
        $region30: #{tpu_custom_call.1} parent=11 // pred_check_branch
          %324 = sbr.rel (%p322) target = $region32
        $region31: #{tpu_custom_call.1} parent=11 // pred_region
          %326 = vsyncadd [#allocation9], 0
          %s327 = sshll.u32 %s6, 4
          %s328 = int_to_ptr.hbm [resolvable:$true] %s327
          %s329 = sshll.u32 [#allocation10], 4
          %s330 = int_to_ptr.vmem [resolvable:$true] %s329
          %335 = dma.hbm_to_vmem [thread:$0]  %s328, 512, %s330, [#allocation9], 128, 128, 8
        $region32: #{tpu_custom_call.1} parent=11 // pred_fallthru
          _
        // Predicated region
        $region33: #{tpu_custom_call.1} parent=11 // pred_check
          %p336 = pneg %p205
        $region34: #{tpu_custom_call.1} parent=11 // pred_check_branch
          %338 = sbr.rel (%p336) target = $region36
        $region35: #{tpu_custom_call.1} parent=11 // pred_region
          _
        $region36: #{tpu_custom_call.1} parent=11 // pred_fallthru
          _
        // Predicated region
        $region37: #{tpu_custom_call.1} parent=11 // pred_check
          %p339 = pneg %p226
        $region38: #{tpu_custom_call.1} parent=11 // pred_check_branch
          %341 = sbr.rel (%p339) target = $region40
        $region39: #{tpu_custom_call.1} parent=11 // pred_region
          %343 = vsyncadd [#allocation12], 0
          %s344 = sshll.u32 %s8, 4
          %s345 = int_to_ptr.hbm [resolvable:$true] %s344
          %s346 = sshll.u32 [#allocation11], 4
          %s347 = int_to_ptr.vmem [resolvable:$true] %s346
          %352 = dma.hbm_to_vmem [thread:$0]  %s345, 512, %s347, [#allocation12], 128, 128, 8
        $region40: #{tpu_custom_call.1} parent=11 // pred_fallthru
          _
        // Predicated region
        $region41: #{tpu_custom_call.1} parent=11 // pred_check
          %p353 = pneg %p247
        $region42: #{tpu_custom_call.1} parent=11 // pred_check_branch
          %355 = sbr.rel (%p353) target = $region44
        $region43: #{tpu_custom_call.1} parent=11 // pred_region
          _
        $region44: #{tpu_custom_call.1} parent=11 // pred_fallthru
          _
      $region12: #{tpu_custom_call.1} parent=5 // pred_fallthru
        _
      %p356 = scmp.lt.s32.totalorder %s27, 2
      // Predicated region
      $region45: #{tpu_custom_call.1} parent=5 // pred_check
        %p357 = pneg %p356
      $region46: #{tpu_custom_call.1} parent=5 // pred_check_branch
        %359 = sbr.rel (%p357) target = $region48
      $region47: #{tpu_custom_call.1} parent=5 // pred_region
        // Predicated region
        $region49: #{tpu_custom_call.1} parent=47 // pred_check
          %p360 = pneg %p47
        $region50: #{tpu_custom_call.1} parent=47 // pred_check_branch
          %362 = sbr.rel (%p360) target = $region52
        $region51: #{tpu_custom_call.1} parent=47 // pred_region
          %s363 = sand.u32 %s37, 1
          %s364 = scalar_lea.sflag [#allocation3], %s363
          %s365 = sand.u32 %s37, 1
          %s366 = smul.addr %s365, 32
          %s367 = scalar_lea.vmem [#allocation2], %s366
          %s368 = smul.u32 4, %s27
          %370 = vsyncadd %s364, 0
          %s371 = smul.addr %s368, 8
          %s372 = scalar_lea.hbm %s0, %s371
          %s373 = sshll.u32 %s372, 4
          %s374 = int_to_ptr.hbm [resolvable:$true] %s373
          %s375 = sshll.u32 %s367, 4
          %s376 = int_to_ptr.vmem [resolvable:$true] %s375
          %381 = dma.hbm_to_vmem [thread:$0]  %s374, 512, %s376, %s364, 128, 128, 8
        $region52: #{tpu_custom_call.1} parent=47 // pred_fallthru
          _
        // Predicated region
        $region53: #{tpu_custom_call.1} parent=47 // pred_check
          %p382 = pneg %p73
        $region54: #{tpu_custom_call.1} parent=47 // pred_check_branch
          %384 = sbr.rel (%p382) target = $region56
        $region55: #{tpu_custom_call.1} parent=47 // pred_region
          %s385 = sand.u32 %s27, 1
          %s386 = scalar_lea.sflag [#allocation6], %s385
          %s387 = sand.u32 %s63, 1
          %s388 = smul.addr %s387, 32
          %s389 = scalar_lea.vmem [#allocation5], %s388
          %s390 = smul.u32 4, %s27
          %392 = vsyncadd %s386, 0
          %s393 = smul.addr %s390, 8
          %s394 = scalar_lea.hbm %s1, %s393
          %s395 = sshll.u32 %s394, 4
          %s396 = int_to_ptr.hbm [resolvable:$true] %s395
          %s397 = sshll.u32 %s389, 4
          %s398 = int_to_ptr.vmem [resolvable:$true] %s397
          %403 = dma.hbm_to_vmem [thread:$0]  %s396, 512, %s398, %s386, 128, 128, 8
        $region56: #{tpu_custom_call.1} parent=47 // pred_fallthru
          _
      $region48: #{tpu_custom_call.1} parent=5 // pred_fallthru
        _
      %p404 = scmp.le.s32.totalorder 1, %s27
      %p405 = scmp.lt.s32.totalorder %s27, 3
      %p406 = pnand %p404, %p405
      %p407 = pneg %p406
      // Predicated region
      $region57: #{tpu_custom_call.1} parent=5 // pred_check
        _
      $region58: #{tpu_custom_call.1} parent=5 // pred_check_branch
        %409 = sbr.rel (%p406) target = $region60
      $region59: #{tpu_custom_call.1} parent=5 // pred_region
        %s410 = ssub.s32 %s27, 1
        %s411 = sand.u32 %s40, 1
        %s412 = scalar_lea.sflag [#allocation3], %s411
        %s413 = sand.u32 %s40, 1
        %s414 = smul.addr %s413, 32
        %s415 = scalar_lea.vmem [#allocation2], %s414
        // Predicated region
        $region61: #{tpu_custom_call.1} parent=59 // pred_check
          %p416 = pneg %p53
        $region62: #{tpu_custom_call.1} parent=59 // pred_check_branch
          %418 = sbr.rel (%p416) target = $region64
        $region63: #{tpu_custom_call.1} parent=59 // pred_region
          %420 = dma.done %s412, 512
        $region64: #{tpu_custom_call.1} parent=59 // pred_fallthru
          _
        %s421 = sand.u32 %s32, 1
        %s422 = scalar_lea.sflag [#allocation6], %s421
        %s423 = sand.u32 %s66, 1
        %s424 = smul.addr %s423, 32
        %s425 = scalar_lea.vmem [#allocation5], %s424
        // Predicated region
        $region65: #{tpu_custom_call.1} parent=59 // pred_check
          %p426 = pneg %p79
        $region66: #{tpu_custom_call.1} parent=59 // pred_check_branch
          %428 = sbr.rel (%p426) target = $region68
        $region67: #{tpu_custom_call.1} parent=59 // pred_region
          %430 = dma.done %s422, 512
        $region68: #{tpu_custom_call.1} parent=59 // pred_fallthru
          _
        // Predicated region
        $region69: #{tpu_custom_call.1} parent=59 // pred_check
          %p431 = pneg %p100
        $region70: #{tpu_custom_call.1} parent=59 // pred_check_branch
          %433 = sbr.rel (%p431) target = $region72
        $region71: #{tpu_custom_call.1} parent=59 // pred_region
          %435 = dma.done [#allocation6], 512
        $region72: #{tpu_custom_call.1} parent=59 // pred_fallthru
          _
        // Predicated region
        $region73: #{tpu_custom_call.1} parent=59 // pred_check
          %p436 = pneg %p142
        $region74: #{tpu_custom_call.1} parent=59 // pred_check_branch
          %438 = sbr.rel (%p436) target = $region76
        $region75: #{tpu_custom_call.1} parent=59 // pred_region
          %440 = dma.done [#allocation9], 512
        $region76: #{tpu_custom_call.1} parent=59 // pred_fallthru
          _
        // Predicated region
        $region77: #{tpu_custom_call.1} parent=59 // pred_check
          %p441 = pneg %p184
        $region78: #{tpu_custom_call.1} parent=59 // pred_check_branch
          %443 = sbr.rel (%p441) target = $region80
        $region79: #{tpu_custom_call.1} parent=59 // pred_region
          %445 = dma.done [#allocation9], 512
        $region80: #{tpu_custom_call.1} parent=59 // pred_fallthru
          _
        // Predicated region
        $region81: #{tpu_custom_call.1} parent=59 // pred_check
          %p446 = pneg %p226
        $region82: #{tpu_custom_call.1} parent=59 // pred_check_branch
          %448 = sbr.rel (%p446) target = $region84
        $region83: #{tpu_custom_call.1} parent=59 // pred_region
          %450 = dma.done [#allocation12], 512
        $region84: #{tpu_custom_call.1} parent=59 // pred_fallthru
          _
        %s451 = sand.u32 %s40, 1
        %s452 = scalar_lea.sflag [#allocation3], %s451
        %s453 = sand.u32 %s40, 1
        %s454 = smul.addr %s453, 32
        %s455 = scalar_lea.vmem [#allocation2], %s454
        %p456 = pneg %p53
        %p457 = pneg %p50
        %s458 = sand.u32 %s32, 1
        %s459 = scalar_lea.sflag [#allocation6], %s458
        %s460 = sand.u32 %s66, 1
        %s461 = smul.addr %s460, 32
        %s462 = scalar_lea.vmem [#allocation5], %s461
        %p463 = pneg %p79
        %p464 = pneg %p76
        %p465 = pneg %p100
        %p466 = pneg %p97
        %p467 = pneg %p121
        %p468 = pneg %p118
        %p469 = pneg %p142
        %p470 = pneg %p139
        %p471 = pneg %p163
        %p472 = pneg %p160
        %p473 = pneg %p184
        %p474 = pneg %p181
        %p475 = pneg %p205
        %p476 = pneg %p202
        %p477 = pneg %p226
        %p478 = pneg %p223
        %p479 = pneg %p247
        %p480 = pneg %p244
        %p481 = pneg %p273
        %p482 = pneg %p270
        %s483 = sand.u32 %s260, 1
        %s484 = scalar_lea.sflag [#allocation4], %s483
        %s485 = sand.u32 %s260, 1
        %s486 = smul.addr %s485, 32
        %s487 = scalar_lea.vmem [#allocation13], %s486
        %s488 = smul.u32 4, %s32
        %s489 = smul.u32 4, %s32
        %s490 = smul.u32 4, %s32
        %v491 = vld [vmem:[%s415] sm:$0xff]
        %v492 = vld [vmem:[%s415 + $0x8] sm:$0xff]
        %v493 = vld [vmem:[%s415 + $0x10] sm:$0xff]
        %v494 = vld [vmem:[%s415 + $0x18] sm:$0xff]
        %v495 = vld [vmem:[%s425] sm:$0xff]
        %v496 = vld [vmem:[%s425 + $0x8] sm:$0xff]
        %v497 = vld [vmem:[%s425 + $0x10] sm:$0xff]
        %v498 = vld [vmem:[%s425 + $0x18] sm:$0xff]
        %v499 = vld [vmem:[#allocation7] sm:$0xff]
        %v500 = vld [vmem:[#allocation7 + $0x8] sm:$0xff]
        %v501 = vld [vmem:[#allocation7 + $0x10] sm:$0xff]
        %v502 = vld [vmem:[#allocation7 + $0x18] sm:$0xff]
        %v503 = vld [vmem:[%s3] sm:$0x1]
        %v505 = vperm.slane %v503, 0
        %vm507 = vcmask 261120
        %v509 = vsel %vm507, %v491, 0
        %v512 = vsel %vm507, %v492, 0
        %v515 = vsel %vm507, %v493, 0
        %v518 = vsel %vm507, %v494, 0
        %520 = vmatpush.msra.mxu0 0.0
        %521 = vmatpush.msra.mxu0 0.0
        %522 = vmatpush.msra.mxu0 0.0
        %523 = vmatpush.msra.mxu0 0.0
        %524 = vmatpush.msra.mxu0 0.0
        %525 = vmatpush.msra.mxu0 0.0
        %526 = vmatpush.msra.mxu0 0.0
        %527 = vmatpush.msra.mxu0 0.0
        %528 = vmatpush.msra.mxu0 0.0
        %529 = vmatpush.msra.mxu0 0.0
        %530 = vmatpush.msra.mxu0 0.0
        %531 = vmatpush.msra.mxu0 0.0
        %532 = vmatpush.msra.mxu0 %v502
        %533 = vmatpush.msra.mxu0 %v501
        %534 = vmatpush.msra.mxu0 %v500
        %535 = vmatpush.msra.mxu0 %v499
        %536 = vmatmul.f32.gmra.mxu0 %v509
        %v537 = vpop.f32.mrf.mxu0
        %v538 = vadd.f32 %v505, %v537
        %539 = vmatmul.f32.gmra.mxu0 %v512
        %v540 = vpop.f32.mrf.mxu0
        %v541 = vadd.f32 %v505, %v540
        %542 = vmatmul.f32.gmra.mxu0 %v515
        %v543 = vpop.f32.mrf.mxu0
        %v544 = vadd.f32 %v505, %v543
        %545 = vmatmul.f32.gmra.mxu0 %v518
        %v546 = vpop.f32.mrf.mxu0
        %v547 = vadd.f32 %v505, %v546
        %548 = vdwg.mxu0
        %v549 = vld [vmem:[#allocation8] sm:$0xff]
        %v550 = vld [vmem:[#allocation8 + $0x8] sm:$0xff]
        %v551 = vld [vmem:[#allocation8 + $0x10] sm:$0xff]
        %v552 = vld [vmem:[#allocation8 + $0x18] sm:$0xff]
        %v553 = vld [vmem:[%s5] sm:$0x1]
        %v555 = vperm.slane %v553, 0
        %v558 = vsel %vm507, %v495, 0
        %v561 = vsel %vm507, %v496, 0
        %v564 = vsel %vm507, %v497, 0
        %v567 = vsel %vm507, %v498, 0
        %569 = vmatpush.msra.mxu0 0.0
        %570 = vmatpush.msra.mxu0 0.0
        %571 = vmatpush.msra.mxu0 0.0
        %572 = vmatpush.msra.mxu0 0.0
        %573 = vmatpush.msra.mxu0 0.0
        %574 = vmatpush.msra.mxu0 0.0
        %575 = vmatpush.msra.mxu0 0.0
        %576 = vmatpush.msra.mxu0 0.0
        %577 = vmatpush.msra.mxu0 0.0
        %578 = vmatpush.msra.mxu0 0.0
        %579 = vmatpush.msra.mxu0 0.0
        %580 = vmatpush.msra.mxu0 0.0
        %581 = vmatpush.msra.mxu0 %v552
        %582 = vmatpush.msra.mxu0 %v551
        %583 = vmatpush.msra.mxu0 %v550
        %584 = vmatpush.msra.mxu0 %v549
        %585 = vmatmul.f32.gmra.mxu0 %v558
        %v586 = vpop.f32.mrf.mxu0
        %v587 = vadd.f32 %v555, %v586
        %588 = vmatmul.f32.gmra.mxu0 %v561
        %v589 = vpop.f32.mrf.mxu0
        %v590 = vadd.f32 %v555, %v589
        %591 = vmatmul.f32.gmra.mxu0 %v564
        %v592 = vpop.f32.mrf.mxu0
        %v593 = vadd.f32 %v555, %v592
        %594 = vmatmul.f32.gmra.mxu0 %v567
        %v595 = vpop.f32.mrf.mxu0
        %v596 = vadd.f32 %v555, %v595
        %597 = vdwg.mxu0
        %v598 = vld [vmem:[#allocation10] sm:$0xff]
        %v599 = vld [vmem:[#allocation10 + $0x8] sm:$0xff]
        %v600 = vld [vmem:[#allocation10 + $0x10] sm:$0xff]
        %v601 = vld [vmem:[#allocation10 + $0x18] sm:$0xff]
        %v602 = vld [vmem:[%s7] sm:$0x1]
        %v604 = vperm.slane %v602, 0
        %606 = vmatpush.msra.mxu0 0.0
        %607 = vmatpush.msra.mxu0 0.0
        %608 = vmatpush.msra.mxu0 0.0
        %609 = vmatpush.msra.mxu0 0.0
        %610 = vmatpush.msra.mxu0 0.0
        %611 = vmatpush.msra.mxu0 0.0
        %612 = vmatpush.msra.mxu0 0.0
        %613 = vmatpush.msra.mxu0 0.0
        %614 = vmatpush.msra.mxu0 0.0
        %615 = vmatpush.msra.mxu0 0.0
        %616 = vmatpush.msra.mxu0 0.0
        %617 = vmatpush.msra.mxu0 0.0
        %618 = vmatpush.msra.mxu0 %v601
        %619 = vmatpush.msra.mxu0 %v600
        %620 = vmatpush.msra.mxu0 %v599
        %621 = vmatpush.msra.mxu0 %v598
        %622 = vmatmul.f32.gmra.mxu0 %v558
        %v623 = vpop.f32.mrf.mxu0
        %v624 = vadd.f32 %v604, %v623
        %625 = vmatmul.f32.gmra.mxu0 %v561
        %v626 = vpop.f32.mrf.mxu0
        %v627 = vadd.f32 %v604, %v626
        %628 = vmatmul.f32.gmra.mxu0 %v564
        %v629 = vpop.f32.mrf.mxu0
        %v630 = vadd.f32 %v604, %v629
        %631 = vmatmul.f32.gmra.mxu0 %v567
        %v632 = vpop.f32.mrf.mxu0
        %v633 = vadd.f32 %v604, %v632
        %634 = vdwg.mxu0
        %v635 = vmul.f32 %v538, 0.17677669
        %v636 = vmul.f32 %v541, 0.17677669
        %v637 = vmul.f32 %v544, 0.17677669
        %v638 = vmul.f32 %v547, 0.17677669
        %vm639 = vcmask 64512
        %v641 = vsel %vm639, %v635, 0
        %v644 = vsel %vm639, %v587, 0
        %646 = vmatpush.xpose.msra.mxu0 0.0
        %647 = vmatpush.xpose.msra.mxu0 0.0
        %648 = vmatpush.xpose.msra.mxu0 0.0
        %649 = vmatpush.xpose.msra.mxu0 0.0
        %650 = vmatpush.xpose.msra.mxu0 0.0
        %651 = vmatpush.xpose.msra.mxu0 0.0
        %652 = vmatpush.xpose.msra.mxu0 0.0
        %653 = vmatpush.xpose.msra.mxu0 0.0
        %654 = vmatpush.xpose.msra.mxu0 0.0
        %655 = vmatpush.xpose.msra.mxu0 0.0
        %656 = vmatpush.xpose.msra.mxu0 0.0
        %657 = vmatpush.xpose.msra.mxu0 0.0
        %658 = vmatpush.xpose.msra.mxu0 0.0
        %659 = vmatpush.xpose.msra.mxu0 0.0
        %660 = vmatpush.xpose.msra.mxu0 0.0
        %661 = vmatpush.xpose.msra.mxu0 %v644
        %662 = vmatmul.f32.gmra.mxu0 %v641
        %v663 = vpop.f32.mrf.mxu0
        %v664 = vadd.f32 0.0, %v663
        %665 = vdwg.mxu0
        %v667 = vsel %vm639, %v636, 0
        %v670 = vsel %vm639, %v590, 0
        %672 = vmatpush.xpose.msra.mxu0 0.0
        %673 = vmatpush.xpose.msra.mxu0 0.0
        %674 = vmatpush.xpose.msra.mxu0 0.0
        %675 = vmatpush.xpose.msra.mxu0 0.0
        %676 = vmatpush.xpose.msra.mxu0 0.0
        %677 = vmatpush.xpose.msra.mxu0 0.0
        %678 = vmatpush.xpose.msra.mxu0 0.0
        %679 = vmatpush.xpose.msra.mxu0 0.0
        %680 = vmatpush.xpose.msra.mxu0 0.0
        %681 = vmatpush.xpose.msra.mxu0 0.0
        %682 = vmatpush.xpose.msra.mxu0 0.0
        %683 = vmatpush.xpose.msra.mxu0 0.0
        %684 = vmatpush.xpose.msra.mxu0 0.0
        %685 = vmatpush.xpose.msra.mxu0 0.0
        %686 = vmatpush.xpose.msra.mxu0 0.0
        %687 = vmatpush.xpose.msra.mxu0 %v670
        %688 = vmatmul.f32.gmra.mxu0 %v667
        %v689 = vpop.f32.mrf.mxu0
        %v690 = vadd.f32 0.0, %v689
        %691 = vdwg.mxu0
        %v693 = vsel %vm639, %v637, 0
        %v696 = vsel %vm639, %v593, 0
        %698 = vmatpush.xpose.msra.mxu0 0.0
        %699 = vmatpush.xpose.msra.mxu0 0.0
        %700 = vmatpush.xpose.msra.mxu0 0.0
        %701 = vmatpush.xpose.msra.mxu0 0.0
        %702 = vmatpush.xpose.msra.mxu0 0.0
        %703 = vmatpush.xpose.msra.mxu0 0.0
        %704 = vmatpush.xpose.msra.mxu0 0.0
        %705 = vmatpush.xpose.msra.mxu0 0.0
        %706 = vmatpush.xpose.msra.mxu0 0.0
        %707 = vmatpush.xpose.msra.mxu0 0.0
        %708 = vmatpush.xpose.msra.mxu0 0.0
        %709 = vmatpush.xpose.msra.mxu0 0.0
        %710 = vmatpush.xpose.msra.mxu0 0.0
        %711 = vmatpush.xpose.msra.mxu0 0.0
        %712 = vmatpush.xpose.msra.mxu0 0.0
        %713 = vmatpush.xpose.msra.mxu0 %v696
        %714 = vmatmul.f32.gmra.mxu0 %v693
        %v715 = vpop.f32.mrf.mxu0
        %v716 = vadd.f32 0.0, %v715
        %717 = vdwg.mxu0
        %v719 = vsel %vm639, %v638, 0
        %v722 = vsel %vm639, %v596, 0
        %724 = vmatpush.xpose.msra.mxu0 0.0
        %725 = vmatpush.xpose.msra.mxu0 0.0
        %726 = vmatpush.xpose.msra.mxu0 0.0
        %727 = vmatpush.xpose.msra.mxu0 0.0
        %728 = vmatpush.xpose.msra.mxu0 0.0
        %729 = vmatpush.xpose.msra.mxu0 0.0
        %730 = vmatpush.xpose.msra.mxu0 0.0
        %731 = vmatpush.xpose.msra.mxu0 0.0
        %732 = vmatpush.xpose.msra.mxu0 0.0
        %733 = vmatpush.xpose.msra.mxu0 0.0
        %734 = vmatpush.xpose.msra.mxu0 0.0
        %735 = vmatpush.xpose.msra.mxu0 0.0
        %736 = vmatpush.xpose.msra.mxu0 0.0
        %737 = vmatpush.xpose.msra.mxu0 0.0
        %738 = vmatpush.xpose.msra.mxu0 0.0
        %739 = vmatpush.xpose.msra.mxu0 %v722
        %740 = vmatmul.f32.gmra.mxu0 %v719
        %v741 = vpop.f32.mrf.mxu0
        %v742 = vadd.f32 0.0, %v741
        %743 = vdwg.mxu0
        %v744 = vsel %vm639, %v664, -inf
        %745 = vmax.xlane.f32.xlu0 %v744
        %v746 = vpop.xlane.xlu0 %745
        %v747 = vsel %vm639, %v690, -inf
        %748 = vmax.xlane.f32.xlu0 %v747
        %v749 = vpop.xlane.xlu0 %748
        %v750 = vsel %vm639, %v716, -inf
        %751 = vmax.xlane.f32.xlu0 %v750
        %v752 = vpop.xlane.xlu0 %751
        %v753 = vsel %vm639, %v742, -inf
        %754 = vmax.xlane.f32.xlu0 %v753
        %v755 = vpop.xlane.xlu0 %754
        %v756 = vsub.f32 %v664, %v746
        %v757 = vsub.f32 %v690, %v749
        %v758 = vsub.f32 %v716, %v752
        %v759 = vsub.f32 %v742, %v755
        %v760 = vmul.f32 %v756, 1.442695
        %v761 = vpow.pop %v760
        %v762 = vmul.f32 %v757, 1.442695
        %v763 = vpow.pop %v762
        %v764 = vmul.f32 %v758, 1.442695
        %v765 = vpow.pop %v764
        %v766 = vmul.f32 %v759, 1.442695
        %v767 = vpow.pop %v766
        %v768 = vsel %vm639, %v761, 0.0
        %769 = vadd.xlane.f32.xlu0 %v768
        %v770 = vpop.xlane.xlu0 %769
        %v771 = vsel %vm639, %v763, 0.0
        %772 = vadd.xlane.f32.xlu0 %v771
        %v773 = vpop.xlane.xlu0 %772
        %v774 = vsel %vm639, %v765, 0.0
        %775 = vadd.xlane.f32.xlu0 %v774
        %v776 = vpop.xlane.xlu0 %775
        %v777 = vsel %vm639, %v767, 0.0
        %778 = vadd.xlane.f32.xlu0 %v777
        %v779 = vpop.xlane.xlu0 %778
        %v780 = vrcp.pop %v770
        %v781 = vrcp.pop %v773
        %v782 = vrcp.pop %v776
        %v783 = vrcp.pop %v779
        %v784 = vmul.f32 %v761, %v780
        %v785 = vmul.f32 %v763, %v781
        %v786 = vmul.f32 %v765, %v782
        %v787 = vmul.f32 %v767, %v783
        %v789 = vsel %vm639, %v784, 0
        %791 = vmatpush.msra.mxu0 0.0
        %792 = vmatpush.msra.mxu0 0.0
        %793 = vmatpush.msra.mxu0 0.0
        %794 = vmatpush.msra.mxu0 0.0
        %795 = vmatpush.msra.mxu0 0.0
        %796 = vmatpush.msra.mxu0 0.0
        %797 = vmatpush.msra.mxu0 0.0
        %798 = vmatpush.msra.mxu0 0.0
        %799 = vmatpush.msra.mxu0 0.0
        %800 = vmatpush.msra.mxu0 0.0
        %801 = vmatpush.msra.mxu0 0.0
        %802 = vmatpush.msra.mxu0 0.0
        %803 = vmatpush.msra.mxu0 0.0
        %804 = vmatpush.msra.mxu0 0.0
        %805 = vmatpush.msra.mxu0 0.0
        %806 = vmatpush.msra.mxu0 %v624
        %807 = vmatmul.f32.gmra.mxu0 %v789
        %v808 = vpop.f32.mrf.mxu0
        %v809 = vadd.f32 0.0, %v808
        %810 = vdwg.mxu0
        %v812 = vsel %vm639, %v785, 0
        %814 = vmatpush.msra.mxu0 0.0
        %815 = vmatpush.msra.mxu0 0.0
        %816 = vmatpush.msra.mxu0 0.0
        %817 = vmatpush.msra.mxu0 0.0
        %818 = vmatpush.msra.mxu0 0.0
        %819 = vmatpush.msra.mxu0 0.0
        %820 = vmatpush.msra.mxu0 0.0
        %821 = vmatpush.msra.mxu0 0.0
        %822 = vmatpush.msra.mxu0 0.0
        %823 = vmatpush.msra.mxu0 0.0
        %824 = vmatpush.msra.mxu0 0.0
        %825 = vmatpush.msra.mxu0 0.0
        %826 = vmatpush.msra.mxu0 0.0
        %827 = vmatpush.msra.mxu0 0.0
        %828 = vmatpush.msra.mxu0 0.0
        %829 = vmatpush.msra.mxu0 %v627
        %830 = vmatmul.f32.gmra.mxu0 %v812
        %v831 = vpop.f32.mrf.mxu0
        %v832 = vadd.f32 0.0, %v831
        %833 = vdwg.mxu0
        %v835 = vsel %vm639, %v786, 0
        %837 = vmatpush.msra.mxu0 0.0
        %838 = vmatpush.msra.mxu0 0.0
        %839 = vmatpush.msra.mxu0 0.0
        %840 = vmatpush.msra.mxu0 0.0
        %841 = vmatpush.msra.mxu0 0.0
        %842 = vmatpush.msra.mxu0 0.0
        %843 = vmatpush.msra.mxu0 0.0
        %844 = vmatpush.msra.mxu0 0.0
        %845 = vmatpush.msra.mxu0 0.0
        %846 = vmatpush.msra.mxu0 0.0
        %847 = vmatpush.msra.mxu0 0.0
        %848 = vmatpush.msra.mxu0 0.0
        %849 = vmatpush.msra.mxu0 0.0
        %850 = vmatpush.msra.mxu0 0.0
        %851 = vmatpush.msra.mxu0 0.0
        %852 = vmatpush.msra.mxu0 %v630
        %853 = vmatmul.f32.gmra.mxu0 %v835
        %v854 = vpop.f32.mrf.mxu0
        %v855 = vadd.f32 0.0, %v854
        %856 = vdwg.mxu0
        %v858 = vsel %vm639, %v787, 0
        %860 = vmatpush.msra.mxu0 0.0
        %861 = vmatpush.msra.mxu0 0.0
        %862 = vmatpush.msra.mxu0 0.0
        %863 = vmatpush.msra.mxu0 0.0
        %864 = vmatpush.msra.mxu0 0.0
        %865 = vmatpush.msra.mxu0 0.0
        %866 = vmatpush.msra.mxu0 0.0
        %867 = vmatpush.msra.mxu0 0.0
        %868 = vmatpush.msra.mxu0 0.0
        %869 = vmatpush.msra.mxu0 0.0
        %870 = vmatpush.msra.mxu0 0.0
        %871 = vmatpush.msra.mxu0 0.0
        %872 = vmatpush.msra.mxu0 0.0
        %873 = vmatpush.msra.mxu0 0.0
        %874 = vmatpush.msra.mxu0 0.0
        %875 = vmatpush.msra.mxu0 %v633
        %876 = vmatmul.f32.gmra.mxu0 %v858
        %v877 = vpop.f32.mrf.mxu0
        %v878 = vadd.f32 0.0, %v877
        %879 = vdwg.mxu0
        %v880 = vld [vmem:[#allocation11] sm:$0xff]
        %881 = vrot.lane.b32.xlu0 %v635, 120
        %v882 = vpop.permute.xlu0 %881
        %883 = vrot.lane.b32.xlu0 %v587, 120
        %v884 = vpop.permute.xlu0 %883
        %v885 = vsel %vm639, %v882, 0
        %v887 = vsel %vm639, %v884, 0
        %889 = vmatpush.xpose.msra.mxu0 0.0
        %890 = vmatpush.xpose.msra.mxu0 0.0
        %891 = vmatpush.xpose.msra.mxu0 0.0
        %892 = vmatpush.xpose.msra.mxu0 0.0
        %893 = vmatpush.xpose.msra.mxu0 0.0
        %894 = vmatpush.xpose.msra.mxu0 0.0
        %895 = vmatpush.xpose.msra.mxu0 0.0
        %896 = vmatpush.xpose.msra.mxu0 0.0
        %897 = vmatpush.xpose.msra.mxu0 0.0
        %898 = vmatpush.xpose.msra.mxu0 0.0
        %899 = vmatpush.xpose.msra.mxu0 0.0
        %900 = vmatpush.xpose.msra.mxu0 0.0
        %901 = vmatpush.xpose.msra.mxu0 0.0
        %902 = vmatpush.xpose.msra.mxu0 0.0
        %903 = vmatpush.xpose.msra.mxu0 0.0
        %904 = vmatpush.xpose.msra.mxu0 %v887
        %905 = vmatmul.f32.gmra.mxu0 %v885
        %v906 = vpop.f32.mrf.mxu0
        %v907 = vadd.f32 0.0, %v906
        %908 = vdwg.mxu0
        %909 = vrot.lane.b32.xlu0 %v636, 120
        %v910 = vpop.permute.xlu0 %909
        %911 = vrot.lane.b32.xlu0 %v590, 120
        %v912 = vpop.permute.xlu0 %911
        %v913 = vsel %vm639, %v910, 0
        %v915 = vsel %vm639, %v912, 0
        %917 = vmatpush.xpose.msra.mxu0 0.0
        %918 = vmatpush.xpose.msra.mxu0 0.0
        %919 = vmatpush.xpose.msra.mxu0 0.0
        %920 = vmatpush.xpose.msra.mxu0 0.0
        %921 = vmatpush.xpose.msra.mxu0 0.0
        %922 = vmatpush.xpose.msra.mxu0 0.0
        %923 = vmatpush.xpose.msra.mxu0 0.0
        %924 = vmatpush.xpose.msra.mxu0 0.0
        %925 = vmatpush.xpose.msra.mxu0 0.0
        %926 = vmatpush.xpose.msra.mxu0 0.0
        %927 = vmatpush.xpose.msra.mxu0 0.0
        %928 = vmatpush.xpose.msra.mxu0 0.0
        %929 = vmatpush.xpose.msra.mxu0 0.0
        %930 = vmatpush.xpose.msra.mxu0 0.0
        %931 = vmatpush.xpose.msra.mxu0 0.0
        %932 = vmatpush.xpose.msra.mxu0 %v915
        %933 = vmatmul.f32.gmra.mxu0 %v913
        %v934 = vpop.f32.mrf.mxu0
        %v935 = vadd.f32 0.0, %v934
        %936 = vdwg.mxu0
        %937 = vrot.lane.b32.xlu0 %v637, 120
        %v938 = vpop.permute.xlu0 %937
        %939 = vrot.lane.b32.xlu0 %v593, 120
        %v940 = vpop.permute.xlu0 %939
        %v941 = vsel %vm639, %v938, 0
        %v943 = vsel %vm639, %v940, 0
        %945 = vmatpush.xpose.msra.mxu0 0.0
        %946 = vmatpush.xpose.msra.mxu0 0.0
        %947 = vmatpush.xpose.msra.mxu0 0.0
        %948 = vmatpush.xpose.msra.mxu0 0.0
        %949 = vmatpush.xpose.msra.mxu0 0.0
        %950 = vmatpush.xpose.msra.mxu0 0.0
        %951 = vmatpush.xpose.msra.mxu0 0.0
        %952 = vmatpush.xpose.msra.mxu0 0.0
        %953 = vmatpush.xpose.msra.mxu0 0.0
        %954 = vmatpush.xpose.msra.mxu0 0.0
        %955 = vmatpush.xpose.msra.mxu0 0.0
        %956 = vmatpush.xpose.msra.mxu0 0.0
        %957 = vmatpush.xpose.msra.mxu0 0.0
        %958 = vmatpush.xpose.msra.mxu0 0.0
        %959 = vmatpush.xpose.msra.mxu0 0.0
        %960 = vmatpush.xpose.msra.mxu0 %v943
        %961 = vmatmul.f32.gmra.mxu0 %v941
        %v962 = vpop.f32.mrf.mxu0
        %v963 = vadd.f32 0.0, %v962
        %964 = vdwg.mxu0
        %965 = vrot.lane.b32.xlu0 %v638, 120
        %v966 = vpop.permute.xlu0 %965
        %967 = vrot.lane.b32.xlu0 %v596, 120
        %v968 = vpop.permute.xlu0 %967
        %v969 = vsel %vm639, %v966, 0
        %v971 = vsel %vm639, %v968, 0
        %973 = vmatpush.xpose.msra.mxu0 0.0
        %974 = vmatpush.xpose.msra.mxu0 0.0
        %975 = vmatpush.xpose.msra.mxu0 0.0
        %976 = vmatpush.xpose.msra.mxu0 0.0
        %977 = vmatpush.xpose.msra.mxu0 0.0
        %978 = vmatpush.xpose.msra.mxu0 0.0
        %979 = vmatpush.xpose.msra.mxu0 0.0
        %980 = vmatpush.xpose.msra.mxu0 0.0
        %981 = vmatpush.xpose.msra.mxu0 0.0
        %982 = vmatpush.xpose.msra.mxu0 0.0
        %983 = vmatpush.xpose.msra.mxu0 0.0
        %984 = vmatpush.xpose.msra.mxu0 0.0
        %985 = vmatpush.xpose.msra.mxu0 0.0
        %986 = vmatpush.xpose.msra.mxu0 0.0
        %987 = vmatpush.xpose.msra.mxu0 0.0
        %988 = vmatpush.xpose.msra.mxu0 %v971
        %989 = vmatmul.f32.gmra.mxu0 %v969
        %v990 = vpop.f32.mrf.mxu0
        %v991 = vadd.f32 0.0, %v990
        %992 = vdwg.mxu0
        %v993 = vsel %vm639, %v907, -inf
        %994 = vmax.xlane.f32.xlu0 %v993
        %v995 = vpop.xlane.xlu0 %994
        %v996 = vsel %vm639, %v935, -inf
        %997 = vmax.xlane.f32.xlu0 %v996
        %v998 = vpop.xlane.xlu0 %997
        %v999 = vsel %vm639, %v963, -inf
        %1000 = vmax.xlane.f32.xlu0 %v999
        %v1001 = vpop.xlane.xlu0 %1000
        %v1002 = vsel %vm639, %v991, -inf
        %1003 = vmax.xlane.f32.xlu0 %v1002
        %v1004 = vpop.xlane.xlu0 %1003
        %v1005 = vsub.f32 %v907, %v995
        %v1006 = vsub.f32 %v935, %v998
        %v1007 = vsub.f32 %v963, %v1001
        %v1008 = vsub.f32 %v991, %v1004
        %v1009 = vmul.f32 %v1005, 1.442695
        %v1010 = vpow.pop %v1009
        %v1011 = vmul.f32 %v1006, 1.442695
        %v1012 = vpow.pop %v1011
        %v1013 = vmul.f32 %v1007, 1.442695
        %v1014 = vpow.pop %v1013
        %v1015 = vmul.f32 %v1008, 1.442695
        %v1016 = vpow.pop %v1015
        %v1017 = vsel %vm639, %v1010, 0.0
        %1018 = vadd.xlane.f32.xlu0 %v1017
        %v1019 = vpop.xlane.xlu0 %1018
        %v1020 = vsel %vm639, %v1012, 0.0
        %1021 = vadd.xlane.f32.xlu0 %v1020
        %v1022 = vpop.xlane.xlu0 %1021
        %v1023 = vsel %vm639, %v1014, 0.0
        %1024 = vadd.xlane.f32.xlu0 %v1023
        %v1025 = vpop.xlane.xlu0 %1024
        %v1026 = vsel %vm639, %v1016, 0.0
        %1027 = vadd.xlane.f32.xlu0 %v1026
        %v1028 = vpop.xlane.xlu0 %1027
        %v1029 = vrcp.pop %v1019
        %v1030 = vrcp.pop %v1022
        %v1031 = vrcp.pop %v1025
        %v1032 = vrcp.pop %v1028
        %v1033 = vmul.f32 %v1010, %v1029
        %v1034 = vmul.f32 %v1012, %v1030
        %v1035 = vmul.f32 %v1014, %v1031
        %v1036 = vmul.f32 %v1016, %v1032
        %1038 = vrot.lane.b32.xlu0 %v624, 120
        %v1039 = vpop.permute.xlu0 %1038
        %v1042 = vsel %vm639, %v1033, 0
        %1044 = vmatpush.msra.mxu0 0.0
        %1045 = vmatpush.msra.mxu0 0.0
        %1046 = vmatpush.msra.mxu0 0.0
        %1047 = vmatpush.msra.mxu0 0.0
        %1048 = vmatpush.msra.mxu0 0.0
        %1049 = vmatpush.msra.mxu0 0.0
        %1050 = vmatpush.msra.mxu0 0.0
        %1051 = vmatpush.msra.mxu0 0.0
        %1052 = vmatpush.msra.mxu0 0.0
        %1053 = vmatpush.msra.mxu0 0.0
        %1054 = vmatpush.msra.mxu0 0.0
        %1055 = vmatpush.msra.mxu0 0.0
        %1056 = vmatpush.msra.mxu0 0.0
        %1057 = vmatpush.msra.mxu0 0.0
        %1058 = vmatpush.msra.mxu0 0.0
        %1059 = vmatpush.msra.mxu0 %v1039
        %1060 = vmatmul.f32.gmra.mxu0 %v1042
        %v1061 = vpop.f32.mrf.mxu0
        %v1062 = vadd.f32 0.0, %v1061
        %1063 = vdwg.mxu0
        %1065 = vrot.lane.b32.xlu0 %v627, 120
        %v1066 = vpop.permute.xlu0 %1065
        %v1069 = vsel %vm639, %v1034, 0
        %1071 = vmatpush.msra.mxu0 0.0
        %1072 = vmatpush.msra.mxu0 0.0
        %1073 = vmatpush.msra.mxu0 0.0
        %1074 = vmatpush.msra.mxu0 0.0
        %1075 = vmatpush.msra.mxu0 0.0
        %1076 = vmatpush.msra.mxu0 0.0
        %1077 = vmatpush.msra.mxu0 0.0
        %1078 = vmatpush.msra.mxu0 0.0
        %1079 = vmatpush.msra.mxu0 0.0
        %1080 = vmatpush.msra.mxu0 0.0
        %1081 = vmatpush.msra.mxu0 0.0
        %1082 = vmatpush.msra.mxu0 0.0
        %1083 = vmatpush.msra.mxu0 0.0
        %1084 = vmatpush.msra.mxu0 0.0
        %1085 = vmatpush.msra.mxu0 0.0
        %1086 = vmatpush.msra.mxu0 %v1066
        %1087 = vmatmul.f32.gmra.mxu0 %v1069
        %v1088 = vpop.f32.mrf.mxu0
        %v1089 = vadd.f32 0.0, %v1088
        %1090 = vdwg.mxu0
        %1092 = vrot.lane.b32.xlu0 %v630, 120
        %v1093 = vpop.permute.xlu0 %1092
        %v1096 = vsel %vm639, %v1035, 0
        %1098 = vmatpush.msra.mxu0 0.0
        %1099 = vmatpush.msra.mxu0 0.0
        %1100 = vmatpush.msra.mxu0 0.0
        %1101 = vmatpush.msra.mxu0 0.0
        %1102 = vmatpush.msra.mxu0 0.0
        %1103 = vmatpush.msra.mxu0 0.0
        %1104 = vmatpush.msra.mxu0 0.0
        %1105 = vmatpush.msra.mxu0 0.0
        %1106 = vmatpush.msra.mxu0 0.0
        %1107 = vmatpush.msra.mxu0 0.0
        %1108 = vmatpush.msra.mxu0 0.0
        %1109 = vmatpush.msra.mxu0 0.0
        %1110 = vmatpush.msra.mxu0 0.0
        %1111 = vmatpush.msra.mxu0 0.0
        %1112 = vmatpush.msra.mxu0 0.0
        %1113 = vmatpush.msra.mxu0 %v1093
        %1114 = vmatmul.f32.gmra.mxu0 %v1096
        %v1115 = vpop.f32.mrf.mxu0
        %v1116 = vadd.f32 0.0, %v1115
        %1117 = vdwg.mxu0
        %1119 = vrot.lane.b32.xlu0 %v633, 120
        %v1120 = vpop.permute.xlu0 %1119
        %v1123 = vsel %vm639, %v1036, 0
        %1125 = vmatpush.msra.mxu0 0.0
        %1126 = vmatpush.msra.mxu0 0.0
        %1127 = vmatpush.msra.mxu0 0.0
        %1128 = vmatpush.msra.mxu0 0.0
        %1129 = vmatpush.msra.mxu0 0.0
        %1130 = vmatpush.msra.mxu0 0.0
        %1131 = vmatpush.msra.mxu0 0.0
        %1132 = vmatpush.msra.mxu0 0.0
        %1133 = vmatpush.msra.mxu0 0.0
        %1134 = vmatpush.msra.mxu0 0.0
        %1135 = vmatpush.msra.mxu0 0.0
        %1136 = vmatpush.msra.mxu0 0.0
        %1137 = vmatpush.msra.mxu0 0.0
        %1138 = vmatpush.msra.mxu0 0.0
        %1139 = vmatpush.msra.mxu0 0.0
        %1140 = vmatpush.msra.mxu0 %v1120
        %1141 = vmatmul.f32.gmra.mxu0 %v1123
        %v1142 = vpop.f32.mrf.mxu0
        %v1143 = vadd.f32 0.0, %v1142
        %1144 = vdwg.mxu0
        %v1145 = vld [vmem:[#allocation11 + $0x8] sm:$0xff]
        %v1147 = vsel %vm639, %v1062, 0
        %v1150 = vsel %vm639, %v1089, 0
        %v1153 = vsel %vm639, %v1116, 0
        %v1156 = vsel %vm639, %v1143, 0
        %1158 = vmatpush.msra.mxu0 0.0
        %1159 = vmatpush.msra.mxu0 0.0
        %1160 = vmatpush.msra.mxu0 0.0
        %1161 = vmatpush.msra.mxu0 0.0
        %1162 = vmatpush.msra.mxu0 0.0
        %1163 = vmatpush.msra.mxu0 0.0
        %1164 = vmatpush.msra.mxu0 0.0
        %1165 = vmatpush.msra.mxu0 0.0
        %1166 = vmatpush.msra.mxu0 0.0
        %1167 = vmatpush.msra.mxu0 0.0
        %1168 = vmatpush.msra.mxu0 0.0
        %1169 = vmatpush.msra.mxu0 0.0
        %1170 = vmatpush.msra.mxu0 0.0
        %1171 = vmatpush.msra.mxu0 0.0
        %1172 = vmatpush.msra.mxu0 0.0
        %1173 = vmatpush.msra.mxu0 %v1145
        %1174 = vmatmul.f32.gmra.mxu0 %v1147
        %v1175 = vpop.f32.mrf.mxu0
        %v1176 = vadd.f32 0.0, %v1175
        %1177 = vmatmul.f32.gmra.mxu0 %v1150
        %v1178 = vpop.f32.mrf.mxu0
        %v1179 = vadd.f32 0.0, %v1178
        %1180 = vmatmul.f32.gmra.mxu0 %v1153
        %v1181 = vpop.f32.mrf.mxu0
        %v1182 = vadd.f32 0.0, %v1181
        %1183 = vmatmul.f32.gmra.mxu0 %v1156
        %v1184 = vpop.f32.mrf.mxu0
        %v1185 = vadd.f32 0.0, %v1184
        %1186 = vdwg.mxu0
        %v1188 = vsel %vm639, %v809, 0
        %v1191 = vsel %vm639, %v832, 0
        %v1194 = vsel %vm639, %v855, 0
        %v1197 = vsel %vm639, %v878, 0
        %1199 = vmatpush.msra.mxu0 0.0
        %1200 = vmatpush.msra.mxu0 0.0
        %1201 = vmatpush.msra.mxu0 0.0
        %1202 = vmatpush.msra.mxu0 0.0
        %1203 = vmatpush.msra.mxu0 0.0
        %1204 = vmatpush.msra.mxu0 0.0
        %1205 = vmatpush.msra.mxu0 0.0
        %1206 = vmatpush.msra.mxu0 0.0
        %1207 = vmatpush.msra.mxu0 0.0
        %1208 = vmatpush.msra.mxu0 0.0
        %1209 = vmatpush.msra.mxu0 0.0
        %1210 = vmatpush.msra.mxu0 0.0
        %1211 = vmatpush.msra.mxu0 0.0
        %1212 = vmatpush.msra.mxu0 0.0
        %1213 = vmatpush.msra.mxu0 0.0
        %1214 = vmatpush.msra.mxu0 %v880
        %1215 = vmatmul.f32.gmra.mxu0 %v1188
        %v1216 = vpop.f32.mrf.mxu0
        %v1217 = vadd.f32 %v1176, %v1216
        %1218 = vmatmul.f32.gmra.mxu0 %v1191
        %v1219 = vpop.f32.mrf.mxu0
        %v1220 = vadd.f32 %v1179, %v1219
        %1221 = vmatmul.f32.gmra.mxu0 %v1194
        %v1222 = vpop.f32.mrf.mxu0
        %v1223 = vadd.f32 %v1182, %v1222
        %1224 = vmatmul.f32.gmra.mxu0 %v1197
        %v1225 = vpop.f32.mrf.mxu0
        %v1226 = vadd.f32 %v1185, %v1225
        %1227 = vdwg.mxu0
        %1228 = vrot.lane.b32.xlu0 %v635, 112
        %v1229 = vpop.permute.xlu0 %1228
        %1230 = vrot.lane.b32.xlu0 %v587, 112
        %v1231 = vpop.permute.xlu0 %1230
        %v1232 = vsel %vm639, %v1229, 0
        %v1234 = vsel %vm639, %v1231, 0
        %1236 = vmatpush.xpose.msra.mxu0 0.0
        %1237 = vmatpush.xpose.msra.mxu0 0.0
        %1238 = vmatpush.xpose.msra.mxu0 0.0
        %1239 = vmatpush.xpose.msra.mxu0 0.0
        %1240 = vmatpush.xpose.msra.mxu0 0.0
        %1241 = vmatpush.xpose.msra.mxu0 0.0
        %1242 = vmatpush.xpose.msra.mxu0 0.0
        %1243 = vmatpush.xpose.msra.mxu0 0.0
        %1244 = vmatpush.xpose.msra.mxu0 0.0
        %1245 = vmatpush.xpose.msra.mxu0 0.0
        %1246 = vmatpush.xpose.msra.mxu0 0.0
        %1247 = vmatpush.xpose.msra.mxu0 0.0
        %1248 = vmatpush.xpose.msra.mxu0 0.0
        %1249 = vmatpush.xpose.msra.mxu0 0.0
        %1250 = vmatpush.xpose.msra.mxu0 0.0
        %1251 = vmatpush.xpose.msra.mxu0 %v1234
        %1252 = vmatmul.f32.gmra.mxu0 %v1232
        %v1253 = vpop.f32.mrf.mxu0
        %v1254 = vadd.f32 0.0, %v1253
        %1255 = vdwg.mxu0
        %1256 = vrot.lane.b32.xlu0 %v636, 112
        %v1257 = vpop.permute.xlu0 %1256
        %1258 = vrot.lane.b32.xlu0 %v590, 112
        %v1259 = vpop.permute.xlu0 %1258
        %v1260 = vsel %vm639, %v1257, 0
        %v1262 = vsel %vm639, %v1259, 0
        %1264 = vmatpush.xpose.msra.mxu0 0.0
        %1265 = vmatpush.xpose.msra.mxu0 0.0
        %1266 = vmatpush.xpose.msra.mxu0 0.0
        %1267 = vmatpush.xpose.msra.mxu0 0.0
        %1268 = vmatpush.xpose.msra.mxu0 0.0
        %1269 = vmatpush.xpose.msra.mxu0 0.0
        %1270 = vmatpush.xpose.msra.mxu0 0.0
        %1271 = vmatpush.xpose.msra.mxu0 0.0
        %1272 = vmatpush.xpose.msra.mxu0 0.0
        %1273 = vmatpush.xpose.msra.mxu0 0.0
        %1274 = vmatpush.xpose.msra.mxu0 0.0
        %1275 = vmatpush.xpose.msra.mxu0 0.0
        %1276 = vmatpush.xpose.msra.mxu0 0.0
        %1277 = vmatpush.xpose.msra.mxu0 0.0
        %1278 = vmatpush.xpose.msra.mxu0 0.0
        %1279 = vmatpush.xpose.msra.mxu0 %v1262
        %1280 = vmatmul.f32.gmra.mxu0 %v1260
        %v1281 = vpop.f32.mrf.mxu0
        %v1282 = vadd.f32 0.0, %v1281
        %1283 = vdwg.mxu0
        %1284 = vrot.lane.b32.xlu0 %v637, 112
        %v1285 = vpop.permute.xlu0 %1284
        %1286 = vrot.lane.b32.xlu0 %v593, 112
        %v1287 = vpop.permute.xlu0 %1286
        %v1288 = vsel %vm639, %v1285, 0
        %v1290 = vsel %vm639, %v1287, 0
        %1292 = vmatpush.xpose.msra.mxu0 0.0
        %1293 = vmatpush.xpose.msra.mxu0 0.0
        %1294 = vmatpush.xpose.msra.mxu0 0.0
        %1295 = vmatpush.xpose.msra.mxu0 0.0
        %1296 = vmatpush.xpose.msra.mxu0 0.0
        %1297 = vmatpush.xpose.msra.mxu0 0.0
        %1298 = vmatpush.xpose.msra.mxu0 0.0
        %1299 = vmatpush.xpose.msra.mxu0 0.0
        %1300 = vmatpush.xpose.msra.mxu0 0.0
        %1301 = vmatpush.xpose.msra.mxu0 0.0
        %1302 = vmatpush.xpose.msra.mxu0 0.0
        %1303 = vmatpush.xpose.msra.mxu0 0.0
        %1304 = vmatpush.xpose.msra.mxu0 0.0
        %1305 = vmatpush.xpose.msra.mxu0 0.0
        %1306 = vmatpush.xpose.msra.mxu0 0.0
        %1307 = vmatpush.xpose.msra.mxu0 %v1290
        %1308 = vmatmul.f32.gmra.mxu0 %v1288
        %v1309 = vpop.f32.mrf.mxu0
        %v1310 = vadd.f32 0.0, %v1309
        %1311 = vdwg.mxu0
        %1312 = vrot.lane.b32.xlu0 %v638, 112
        %v1313 = vpop.permute.xlu0 %1312
        %1314 = vrot.lane.b32.xlu0 %v596, 112
        %v1315 = vpop.permute.xlu0 %1314
        %v1316 = vsel %vm639, %v1313, 0
        %v1318 = vsel %vm639, %v1315, 0
        %1320 = vmatpush.xpose.msra.mxu0 0.0
        %1321 = vmatpush.xpose.msra.mxu0 0.0
        %1322 = vmatpush.xpose.msra.mxu0 0.0
        %1323 = vmatpush.xpose.msra.mxu0 0.0
        %1324 = vmatpush.xpose.msra.mxu0 0.0
        %1325 = vmatpush.xpose.msra.mxu0 0.0
        %1326 = vmatpush.xpose.msra.mxu0 0.0
        %1327 = vmatpush.xpose.msra.mxu0 0.0
        %1328 = vmatpush.xpose.msra.mxu0 0.0
        %1329 = vmatpush.xpose.msra.mxu0 0.0
        %1330 = vmatpush.xpose.msra.mxu0 0.0
        %1331 = vmatpush.xpose.msra.mxu0 0.0
        %1332 = vmatpush.xpose.msra.mxu0 0.0
        %1333 = vmatpush.xpose.msra.mxu0 0.0
        %1334 = vmatpush.xpose.msra.mxu0 0.0
        %1335 = vmatpush.xpose.msra.mxu0 %v1318
        %1336 = vmatmul.f32.gmra.mxu0 %v1316
        %v1337 = vpop.f32.mrf.mxu0
        %v1338 = vadd.f32 0.0, %v1337
        %1339 = vdwg.mxu0
        %v1340 = vsel %vm639, %v1254, -inf
        %1341 = vmax.xlane.f32.xlu0 %v1340
        %v1342 = vpop.xlane.xlu0 %1341
        %v1343 = vsel %vm639, %v1282, -inf
        %1344 = vmax.xlane.f32.xlu0 %v1343
        %v1345 = vpop.xlane.xlu0 %1344
        %v1346 = vsel %vm639, %v1310, -inf
        %1347 = vmax.xlane.f32.xlu0 %v1346
        %v1348 = vpop.xlane.xlu0 %1347
        %v1349 = vsel %vm639, %v1338, -inf
        %1350 = vmax.xlane.f32.xlu0 %v1349
        %v1351 = vpop.xlane.xlu0 %1350
        %v1352 = vsub.f32 %v1254, %v1342
        %v1353 = vsub.f32 %v1282, %v1345
        %v1354 = vsub.f32 %v1310, %v1348
        %v1355 = vsub.f32 %v1338, %v1351
        %v1356 = vmul.f32 %v1352, 1.442695
        %v1357 = vpow.pop %v1356
        %v1358 = vmul.f32 %v1353, 1.442695
        %v1359 = vpow.pop %v1358
        %v1360 = vmul.f32 %v1354, 1.442695
        %v1361 = vpow.pop %v1360
        %v1362 = vmul.f32 %v1355, 1.442695
        %v1363 = vpow.pop %v1362
        %v1364 = vsel %vm639, %v1357, 0.0
        %1365 = vadd.xlane.f32.xlu0 %v1364
        %v1366 = vpop.xlane.xlu0 %1365
        %v1367 = vsel %vm639, %v1359, 0.0
        %1368 = vadd.xlane.f32.xlu0 %v1367
        %v1369 = vpop.xlane.xlu0 %1368
        %v1370 = vsel %vm639, %v1361, 0.0
        %1371 = vadd.xlane.f32.xlu0 %v1370
        %v1372 = vpop.xlane.xlu0 %1371
        %v1373 = vsel %vm639, %v1363, 0.0
        %1374 = vadd.xlane.f32.xlu0 %v1373
        %v1375 = vpop.xlane.xlu0 %1374
        %v1376 = vrcp.pop %v1366
        %v1377 = vrcp.pop %v1369
        %v1378 = vrcp.pop %v1372
        %v1379 = vrcp.pop %v1375
        %v1380 = vmul.f32 %v1357, %v1376
        %v1381 = vmul.f32 %v1359, %v1377
        %v1382 = vmul.f32 %v1361, %v1378
        %v1383 = vmul.f32 %v1363, %v1379
        %1384 = vrot.lane.b32.xlu0 %v624, 112
        %v1385 = vpop.permute.xlu0 %1384
        %v1388 = vsel %vm639, %v1380, 0
        %1390 = vmatpush.msra.mxu0 0.0
        %1391 = vmatpush.msra.mxu0 0.0
        %1392 = vmatpush.msra.mxu0 0.0
        %1393 = vmatpush.msra.mxu0 0.0
        %1394 = vmatpush.msra.mxu0 0.0
        %1395 = vmatpush.msra.mxu0 0.0
        %1396 = vmatpush.msra.mxu0 0.0
        %1397 = vmatpush.msra.mxu0 0.0
        %1398 = vmatpush.msra.mxu0 0.0
        %1399 = vmatpush.msra.mxu0 0.0
        %1400 = vmatpush.msra.mxu0 0.0
        %1401 = vmatpush.msra.mxu0 0.0
        %1402 = vmatpush.msra.mxu0 0.0
        %1403 = vmatpush.msra.mxu0 0.0
        %1404 = vmatpush.msra.mxu0 0.0
        %1405 = vmatpush.msra.mxu0 %v1385
        %1406 = vmatmul.f32.gmra.mxu0 %v1388
        %v1407 = vpop.f32.mrf.mxu0
        %v1408 = vadd.f32 0.0, %v1407
        %1409 = vdwg.mxu0
        %1410 = vrot.lane.b32.xlu0 %v627, 112
        %v1411 = vpop.permute.xlu0 %1410
        %v1414 = vsel %vm639, %v1381, 0
        %1416 = vmatpush.msra.mxu0 0.0
        %1417 = vmatpush.msra.mxu0 0.0
        %1418 = vmatpush.msra.mxu0 0.0
        %1419 = vmatpush.msra.mxu0 0.0
        %1420 = vmatpush.msra.mxu0 0.0
        %1421 = vmatpush.msra.mxu0 0.0
        %1422 = vmatpush.msra.mxu0 0.0
        %1423 = vmatpush.msra.mxu0 0.0
        %1424 = vmatpush.msra.mxu0 0.0
        %1425 = vmatpush.msra.mxu0 0.0
        %1426 = vmatpush.msra.mxu0 0.0
        %1427 = vmatpush.msra.mxu0 0.0
        %1428 = vmatpush.msra.mxu0 0.0
        %1429 = vmatpush.msra.mxu0 0.0
        %1430 = vmatpush.msra.mxu0 0.0
        %1431 = vmatpush.msra.mxu0 %v1411
        %1432 = vmatmul.f32.gmra.mxu0 %v1414
        %v1433 = vpop.f32.mrf.mxu0
        %v1434 = vadd.f32 0.0, %v1433
        %1435 = vdwg.mxu0
        %1436 = vrot.lane.b32.xlu0 %v630, 112
        %v1437 = vpop.permute.xlu0 %1436
        %v1440 = vsel %vm639, %v1382, 0
        %1442 = vmatpush.msra.mxu0 0.0
        %1443 = vmatpush.msra.mxu0 0.0
        %1444 = vmatpush.msra.mxu0 0.0
        %1445 = vmatpush.msra.mxu0 0.0
        %1446 = vmatpush.msra.mxu0 0.0
        %1447 = vmatpush.msra.mxu0 0.0
        %1448 = vmatpush.msra.mxu0 0.0
        %1449 = vmatpush.msra.mxu0 0.0
        %1450 = vmatpush.msra.mxu0 0.0
        %1451 = vmatpush.msra.mxu0 0.0
        %1452 = vmatpush.msra.mxu0 0.0
        %1453 = vmatpush.msra.mxu0 0.0
        %1454 = vmatpush.msra.mxu0 0.0
        %1455 = vmatpush.msra.mxu0 0.0
        %1456 = vmatpush.msra.mxu0 0.0
        %1457 = vmatpush.msra.mxu0 %v1437
        %1458 = vmatmul.f32.gmra.mxu0 %v1440
        %v1459 = vpop.f32.mrf.mxu0
        %v1460 = vadd.f32 0.0, %v1459
        %1461 = vdwg.mxu0
        %1462 = vrot.lane.b32.xlu0 %v633, 112
        %v1463 = vpop.permute.xlu0 %1462
        %v1466 = vsel %vm639, %v1383, 0
        %1468 = vmatpush.msra.mxu0 0.0
        %1469 = vmatpush.msra.mxu0 0.0
        %1470 = vmatpush.msra.mxu0 0.0
        %1471 = vmatpush.msra.mxu0 0.0
        %1472 = vmatpush.msra.mxu0 0.0
        %1473 = vmatpush.msra.mxu0 0.0
        %1474 = vmatpush.msra.mxu0 0.0
        %1475 = vmatpush.msra.mxu0 0.0
        %1476 = vmatpush.msra.mxu0 0.0
        %1477 = vmatpush.msra.mxu0 0.0
        %1478 = vmatpush.msra.mxu0 0.0
        %1479 = vmatpush.msra.mxu0 0.0
        %1480 = vmatpush.msra.mxu0 0.0
        %1481 = vmatpush.msra.mxu0 0.0
        %1482 = vmatpush.msra.mxu0 0.0
        %1483 = vmatpush.msra.mxu0 %v1463
        %1484 = vmatmul.f32.gmra.mxu0 %v1466
        %v1485 = vpop.f32.mrf.mxu0
        %v1486 = vadd.f32 0.0, %v1485
        %1487 = vdwg.mxu0
        %v1488 = vld [vmem:[#allocation11 + $0x10] sm:$0xff]
        %v1490 = vsel %vm639, %v1408, 0
        %v1493 = vsel %vm639, %v1434, 0
        %v1496 = vsel %vm639, %v1460, 0
        %v1499 = vsel %vm639, %v1486, 0
        %1501 = vmatpush.msra.mxu0 0.0
        %1502 = vmatpush.msra.mxu0 0.0
        %1503 = vmatpush.msra.mxu0 0.0
        %1504 = vmatpush.msra.mxu0 0.0
        %1505 = vmatpush.msra.mxu0 0.0
        %1506 = vmatpush.msra.mxu0 0.0
        %1507 = vmatpush.msra.mxu0 0.0
        %1508 = vmatpush.msra.mxu0 0.0
        %1509 = vmatpush.msra.mxu0 0.0
        %1510 = vmatpush.msra.mxu0 0.0
        %1511 = vmatpush.msra.mxu0 0.0
        %1512 = vmatpush.msra.mxu0 0.0
        %1513 = vmatpush.msra.mxu0 0.0
        %1514 = vmatpush.msra.mxu0 0.0
        %1515 = vmatpush.msra.mxu0 0.0
        %1516 = vmatpush.msra.mxu0 %v1488
        %1517 = vmatmul.f32.gmra.mxu0 %v1490
        %v1518 = vpop.f32.mrf.mxu0
        %v1519 = vadd.f32 0.0, %v1518
        %1520 = vmatmul.f32.gmra.mxu0 %v1493
        %v1521 = vpop.f32.mrf.mxu0
        %v1522 = vadd.f32 0.0, %v1521
        %1523 = vmatmul.f32.gmra.mxu0 %v1496
        %v1524 = vpop.f32.mrf.mxu0
        %v1525 = vadd.f32 0.0, %v1524
        %1526 = vmatmul.f32.gmra.mxu0 %v1499
        %v1527 = vpop.f32.mrf.mxu0
        %v1528 = vadd.f32 0.0, %v1527
        %1529 = vdwg.mxu0
        %v1530 = vadd.f32 %v1217, %v1519
        %v1531 = vadd.f32 %v1220, %v1522
        %v1532 = vadd.f32 %v1223, %v1525
        %v1533 = vadd.f32 %v1226, %v1528
        %1534 = vrot.lane.b32.xlu0 %v635, 104
        %v1535 = vpop.permute.xlu0 %1534
        %1536 = vrot.lane.b32.xlu0 %v587, 104
        %v1537 = vpop.permute.xlu0 %1536
        %v1538 = vsel %vm639, %v1535, 0
        %v1540 = vsel %vm639, %v1537, 0
        %1542 = vmatpush.xpose.msra.mxu0 0.0
        %1543 = vmatpush.xpose.msra.mxu0 0.0
        %1544 = vmatpush.xpose.msra.mxu0 0.0
        %1545 = vmatpush.xpose.msra.mxu0 0.0
        %1546 = vmatpush.xpose.msra.mxu0 0.0
        %1547 = vmatpush.xpose.msra.mxu0 0.0
        %1548 = vmatpush.xpose.msra.mxu0 0.0
        %1549 = vmatpush.xpose.msra.mxu0 0.0
        %1550 = vmatpush.xpose.msra.mxu0 0.0
        %1551 = vmatpush.xpose.msra.mxu0 0.0
        %1552 = vmatpush.xpose.msra.mxu0 0.0
        %1553 = vmatpush.xpose.msra.mxu0 0.0
        %1554 = vmatpush.xpose.msra.mxu0 0.0
        %1555 = vmatpush.xpose.msra.mxu0 0.0
        %1556 = vmatpush.xpose.msra.mxu0 0.0
        %1557 = vmatpush.xpose.msra.mxu0 %v1540
        %1558 = vmatmul.f32.gmra.mxu0 %v1538
        %v1559 = vpop.f32.mrf.mxu0
        %v1560 = vadd.f32 0.0, %v1559
        %1561 = vdwg.mxu0
        %1562 = vrot.lane.b32.xlu0 %v636, 104
        %v1563 = vpop.permute.xlu0 %1562
        %1564 = vrot.lane.b32.xlu0 %v590, 104
        %v1565 = vpop.permute.xlu0 %1564
        %v1566 = vsel %vm639, %v1563, 0
        %v1568 = vsel %vm639, %v1565, 0
        %1570 = vmatpush.xpose.msra.mxu0 0.0
        %1571 = vmatpush.xpose.msra.mxu0 0.0
        %1572 = vmatpush.xpose.msra.mxu0 0.0
        %1573 = vmatpush.xpose.msra.mxu0 0.0
        %1574 = vmatpush.xpose.msra.mxu0 0.0
        %1575 = vmatpush.xpose.msra.mxu0 0.0
        %1576 = vmatpush.xpose.msra.mxu0 0.0
        %1577 = vmatpush.xpose.msra.mxu0 0.0
        %1578 = vmatpush.xpose.msra.mxu0 0.0
        %1579 = vmatpush.xpose.msra.mxu0 0.0
        %1580 = vmatpush.xpose.msra.mxu0 0.0
        %1581 = vmatpush.xpose.msra.mxu0 0.0
        %1582 = vmatpush.xpose.msra.mxu0 0.0
        %1583 = vmatpush.xpose.msra.mxu0 0.0
        %1584 = vmatpush.xpose.msra.mxu0 0.0
        %1585 = vmatpush.xpose.msra.mxu0 %v1568
        %1586 = vmatmul.f32.gmra.mxu0 %v1566
        %v1587 = vpop.f32.mrf.mxu0
        %v1588 = vadd.f32 0.0, %v1587
        %1589 = vdwg.mxu0
        %1590 = vrot.lane.b32.xlu0 %v637, 104
        %v1591 = vpop.permute.xlu0 %1590
        %1592 = vrot.lane.b32.xlu0 %v593, 104
        %v1593 = vpop.permute.xlu0 %1592
        %v1594 = vsel %vm639, %v1591, 0
        %v1596 = vsel %vm639, %v1593, 0
        %1598 = vmatpush.xpose.msra.mxu0 0.0
        %1599 = vmatpush.xpose.msra.mxu0 0.0
        %1600 = vmatpush.xpose.msra.mxu0 0.0
        %1601 = vmatpush.xpose.msra.mxu0 0.0
        %1602 = vmatpush.xpose.msra.mxu0 0.0
        %1603 = vmatpush.xpose.msra.mxu0 0.0
        %1604 = vmatpush.xpose.msra.mxu0 0.0
        %1605 = vmatpush.xpose.msra.mxu0 0.0
        %1606 = vmatpush.xpose.msra.mxu0 0.0
        %1607 = vmatpush.xpose.msra.mxu0 0.0
        %1608 = vmatpush.xpose.msra.mxu0 0.0
        %1609 = vmatpush.xpose.msra.mxu0 0.0
        %1610 = vmatpush.xpose.msra.mxu0 0.0
        %1611 = vmatpush.xpose.msra.mxu0 0.0
        %1612 = vmatpush.xpose.msra.mxu0 0.0
        %1613 = vmatpush.xpose.msra.mxu0 %v1596
        %1614 = vmatmul.f32.gmra.mxu0 %v1594
        %v1615 = vpop.f32.mrf.mxu0
        %v1616 = vadd.f32 0.0, %v1615
        %1617 = vdwg.mxu0
        %1618 = vrot.lane.b32.xlu0 %v638, 104
        %v1619 = vpop.permute.xlu0 %1618
        %1620 = vrot.lane.b32.xlu0 %v596, 104
        %v1621 = vpop.permute.xlu0 %1620
        %v1622 = vsel %vm639, %v1619, 0
        %v1624 = vsel %vm639, %v1621, 0
        %1626 = vmatpush.xpose.msra.mxu0 0.0
        %1627 = vmatpush.xpose.msra.mxu0 0.0
        %1628 = vmatpush.xpose.msra.mxu0 0.0
        %1629 = vmatpush.xpose.msra.mxu0 0.0
        %1630 = vmatpush.xpose.msra.mxu0 0.0
        %1631 = vmatpush.xpose.msra.mxu0 0.0
        %1632 = vmatpush.xpose.msra.mxu0 0.0
        %1633 = vmatpush.xpose.msra.mxu0 0.0
        %1634 = vmatpush.xpose.msra.mxu0 0.0
        %1635 = vmatpush.xpose.msra.mxu0 0.0
        %1636 = vmatpush.xpose.msra.mxu0 0.0
        %1637 = vmatpush.xpose.msra.mxu0 0.0
        %1638 = vmatpush.xpose.msra.mxu0 0.0
        %1639 = vmatpush.xpose.msra.mxu0 0.0
        %1640 = vmatpush.xpose.msra.mxu0 0.0
        %1641 = vmatpush.xpose.msra.mxu0 %v1624
        %1642 = vmatmul.f32.gmra.mxu0 %v1622
        %v1643 = vpop.f32.mrf.mxu0
        %v1644 = vadd.f32 0.0, %v1643
        %1645 = vdwg.mxu0
        %v1646 = vsel %vm639, %v1560, -inf
        %1647 = vmax.xlane.f32.xlu0 %v1646
        %v1648 = vpop.xlane.xlu0 %1647
        %v1649 = vsel %vm639, %v1588, -inf
        %1650 = vmax.xlane.f32.xlu0 %v1649
        %v1651 = vpop.xlane.xlu0 %1650
        %v1652 = vsel %vm639, %v1616, -inf
        %1653 = vmax.xlane.f32.xlu0 %v1652
        %v1654 = vpop.xlane.xlu0 %1653
        %v1655 = vsel %vm639, %v1644, -inf
        %1656 = vmax.xlane.f32.xlu0 %v1655
        %v1657 = vpop.xlane.xlu0 %1656
        %v1658 = vsub.f32 %v1560, %v1648
        %v1659 = vsub.f32 %v1588, %v1651
        %v1660 = vsub.f32 %v1616, %v1654
        %v1661 = vsub.f32 %v1644, %v1657
        %v1662 = vmul.f32 %v1658, 1.442695
        %v1663 = vpow.pop %v1662
        %v1664 = vmul.f32 %v1659, 1.442695
        %v1665 = vpow.pop %v1664
        %v1666 = vmul.f32 %v1660, 1.442695
        %v1667 = vpow.pop %v1666
        %v1668 = vmul.f32 %v1661, 1.442695
        %v1669 = vpow.pop %v1668
        %v1670 = vsel %vm639, %v1663, 0.0
        %1671 = vadd.xlane.f32.xlu0 %v1670
        %v1672 = vpop.xlane.xlu0 %1671
        %v1673 = vsel %vm639, %v1665, 0.0
        %1674 = vadd.xlane.f32.xlu0 %v1673
        %v1675 = vpop.xlane.xlu0 %1674
        %v1676 = vsel %vm639, %v1667, 0.0
        %1677 = vadd.xlane.f32.xlu0 %v1676
        %v1678 = vpop.xlane.xlu0 %1677
        %v1679 = vsel %vm639, %v1669, 0.0
        %1680 = vadd.xlane.f32.xlu0 %v1679
        %v1681 = vpop.xlane.xlu0 %1680
        %v1682 = vrcp.pop %v1672
        %v1683 = vrcp.pop %v1675
        %v1684 = vrcp.pop %v1678
        %v1685 = vrcp.pop %v1681
        %v1686 = vmul.f32 %v1663, %v1682
        %v1687 = vmul.f32 %v1665, %v1683
        %v1688 = vmul.f32 %v1667, %v1684
        %v1689 = vmul.f32 %v1669, %v1685
        %1690 = vrot.lane.b32.xlu0 %v624, 104
        %v1691 = vpop.permute.xlu0 %1690
        %v1694 = vsel %vm639, %v1686, 0
        %1696 = vmatpush.msra.mxu0 0.0
        %1697 = vmatpush.msra.mxu0 0.0
        %1698 = vmatpush.msra.mxu0 0.0
        %1699 = vmatpush.msra.mxu0 0.0
        %1700 = vmatpush.msra.mxu0 0.0
        %1701 = vmatpush.msra.mxu0 0.0
        %1702 = vmatpush.msra.mxu0 0.0
        %1703 = vmatpush.msra.mxu0 0.0
        %1704 = vmatpush.msra.mxu0 0.0
        %1705 = vmatpush.msra.mxu0 0.0
        %1706 = vmatpush.msra.mxu0 0.0
        %1707 = vmatpush.msra.mxu0 0.0
        %1708 = vmatpush.msra.mxu0 0.0
        %1709 = vmatpush.msra.mxu0 0.0
        %1710 = vmatpush.msra.mxu0 0.0
        %1711 = vmatpush.msra.mxu0 %v1691
        %1712 = vmatmul.f32.gmra.mxu0 %v1694
        %v1713 = vpop.f32.mrf.mxu0
        %v1714 = vadd.f32 0.0, %v1713
        %1715 = vdwg.mxu0
        %1716 = vrot.lane.b32.xlu0 %v627, 104
        %v1717 = vpop.permute.xlu0 %1716
        %v1720 = vsel %vm639, %v1687, 0
        %1722 = vmatpush.msra.mxu0 0.0
        %1723 = vmatpush.msra.mxu0 0.0
        %1724 = vmatpush.msra.mxu0 0.0
        %1725 = vmatpush.msra.mxu0 0.0
        %1726 = vmatpush.msra.mxu0 0.0
        %1727 = vmatpush.msra.mxu0 0.0
        %1728 = vmatpush.msra.mxu0 0.0
        %1729 = vmatpush.msra.mxu0 0.0
        %1730 = vmatpush.msra.mxu0 0.0
        %1731 = vmatpush.msra.mxu0 0.0
        %1732 = vmatpush.msra.mxu0 0.0
        %1733 = vmatpush.msra.mxu0 0.0
        %1734 = vmatpush.msra.mxu0 0.0
        %1735 = vmatpush.msra.mxu0 0.0
        %1736 = vmatpush.msra.mxu0 0.0
        %1737 = vmatpush.msra.mxu0 %v1717
        %1738 = vmatmul.f32.gmra.mxu0 %v1720
        %v1739 = vpop.f32.mrf.mxu0
        %v1740 = vadd.f32 0.0, %v1739
        %1741 = vdwg.mxu0
        %1742 = vrot.lane.b32.xlu0 %v630, 104
        %v1743 = vpop.permute.xlu0 %1742
        %v1746 = vsel %vm639, %v1688, 0
        %1748 = vmatpush.msra.mxu0 0.0
        %1749 = vmatpush.msra.mxu0 0.0
        %1750 = vmatpush.msra.mxu0 0.0
        %1751 = vmatpush.msra.mxu0 0.0
        %1752 = vmatpush.msra.mxu0 0.0
        %1753 = vmatpush.msra.mxu0 0.0
        %1754 = vmatpush.msra.mxu0 0.0
        %1755 = vmatpush.msra.mxu0 0.0
        %1756 = vmatpush.msra.mxu0 0.0
        %1757 = vmatpush.msra.mxu0 0.0
        %1758 = vmatpush.msra.mxu0 0.0
        %1759 = vmatpush.msra.mxu0 0.0
        %1760 = vmatpush.msra.mxu0 0.0
        %1761 = vmatpush.msra.mxu0 0.0
        %1762 = vmatpush.msra.mxu0 0.0
        %1763 = vmatpush.msra.mxu0 %v1743
        %1764 = vmatmul.f32.gmra.mxu0 %v1746
        %v1765 = vpop.f32.mrf.mxu0
        %v1766 = vadd.f32 0.0, %v1765
        %1767 = vdwg.mxu0
        %1768 = vrot.lane.b32.xlu0 %v633, 104
        %v1769 = vpop.permute.xlu0 %1768
        %v1772 = vsel %vm639, %v1689, 0
        %1774 = vmatpush.msra.mxu0 0.0
        %1775 = vmatpush.msra.mxu0 0.0
        %1776 = vmatpush.msra.mxu0 0.0
        %1777 = vmatpush.msra.mxu0 0.0
        %1778 = vmatpush.msra.mxu0 0.0
        %1779 = vmatpush.msra.mxu0 0.0
        %1780 = vmatpush.msra.mxu0 0.0
        %1781 = vmatpush.msra.mxu0 0.0
        %1782 = vmatpush.msra.mxu0 0.0
        %1783 = vmatpush.msra.mxu0 0.0
        %1784 = vmatpush.msra.mxu0 0.0
        %1785 = vmatpush.msra.mxu0 0.0
        %1786 = vmatpush.msra.mxu0 0.0
        %1787 = vmatpush.msra.mxu0 0.0
        %1788 = vmatpush.msra.mxu0 0.0
        %1789 = vmatpush.msra.mxu0 %v1769
        %1790 = vmatmul.f32.gmra.mxu0 %v1772
        %v1791 = vpop.f32.mrf.mxu0
        %v1792 = vadd.f32 0.0, %v1791
        %1793 = vdwg.mxu0
        %v1794 = vld [vmem:[#allocation11 + $0x18] sm:$0xff]
        %v1796 = vsel %vm639, %v1714, 0
        %v1799 = vsel %vm639, %v1740, 0
        %v1802 = vsel %vm639, %v1766, 0
        %v1805 = vsel %vm639, %v1792, 0
        %1807 = vmatpush.msra.mxu0 0.0
        %1808 = vmatpush.msra.mxu0 0.0
        %1809 = vmatpush.msra.mxu0 0.0
        %1810 = vmatpush.msra.mxu0 0.0
        %1811 = vmatpush.msra.mxu0 0.0
        %1812 = vmatpush.msra.mxu0 0.0
        %1813 = vmatpush.msra.mxu0 0.0
        %1814 = vmatpush.msra.mxu0 0.0
        %1815 = vmatpush.msra.mxu0 0.0
        %1816 = vmatpush.msra.mxu0 0.0
        %1817 = vmatpush.msra.mxu0 0.0
        %1818 = vmatpush.msra.mxu0 0.0
        %1819 = vmatpush.msra.mxu0 0.0
        %1820 = vmatpush.msra.mxu0 0.0
        %1821 = vmatpush.msra.mxu0 0.0
        %1822 = vmatpush.msra.mxu0 %v1794
        %1823 = vmatmul.f32.gmra.mxu0 %v1796
        %v1824 = vpop.f32.mrf.mxu0
        %v1825 = vadd.f32 0.0, %v1824
        %1826 = vmatmul.f32.gmra.mxu0 %v1799
        %v1827 = vpop.f32.mrf.mxu0
        %v1828 = vadd.f32 0.0, %v1827
        %1829 = vmatmul.f32.gmra.mxu0 %v1802
        %v1830 = vpop.f32.mrf.mxu0
        %v1831 = vadd.f32 0.0, %v1830
        %1832 = vmatmul.f32.gmra.mxu0 %v1805
        %v1833 = vpop.f32.mrf.mxu0
        %v1834 = vadd.f32 0.0, %v1833
        %1835 = vdwg.mxu0
        %v1836 = vadd.f32 %v1530, %v1825
        %v1837 = vadd.f32 %v1531, %v1828
        %v1838 = vadd.f32 %v1532, %v1831
        %v1839 = vadd.f32 %v1533, %v1834
        %v1840 = vld [vmem:[%s9] sm:$0x1]
        %v1842 = vperm.slane %v1840, 0
        %v1844 = vadd.f32 %v1836, %v1842
        %v1845 = vadd.f32 %v1837, %v1842
        %v1846 = vadd.f32 %v1838, %v1842
        %v1847 = vadd.f32 %v1839, %v1842
        %1848 = vst.msk [vmem:[%s487] sm:$0xff] %vm507, %v1844
        %1849 = vst.msk [vmem:[%s487 + $0x8] sm:$0xff] %vm507, %v1845
        %1850 = vst.msk [vmem:[%s487 + $0x10] sm:$0xff] %vm507, %v1846
        %1851 = vst.msk [vmem:[%s487 + $0x18] sm:$0xff] %vm507, %v1847
        %s1852 = sand.u32 %s260, 1
        %s1853 = scalar_lea.sflag [#allocation4], %s1852
        %s1854 = sand.u32 %s260, 1
        %s1855 = smul.addr %s1854, 32
        %s1856 = scalar_lea.vmem [#allocation13], %s1855
        // Predicated region
        $region85: #{tpu_custom_call.1} parent=59 // pred_check
          %p1857 = pneg %p270
        $region86: #{tpu_custom_call.1} parent=59 // pred_check_branch
          %1859 = sbr.rel (%p1857) target = $region88
        $region87: #{tpu_custom_call.1} parent=59 // pred_region
          %s1860 = smul.u32 4, %s32
          %1862 = vsyncadd %s1853, 0
          %s1863 = smul.addr %s1860, 8
          %s1864 = scalar_lea.hbm %s10, %s1863
          %s1865 = sshll.u32 %s1856, 4
          %s1866 = int_to_ptr.vmem [resolvable:$true] %s1865
          %s1867 = sshll.u32 %s1864, 4
          %s1868 = int_to_ptr.hbm [resolvable:$true] %s1867
          %1873 = dma.vmem_to_hbm [thread:$0]  %s1866, 512, %s1868, %s1853, 128, 128, 8
        $region88: #{tpu_custom_call.1} parent=59 // pred_fallthru
          _
      $region60: #{tpu_custom_call.1} parent=5 // pred_fallthru
        _
      %p1874 = scmp.le.s32.totalorder 2, %s27
      // Predicated region
      $region89: #{tpu_custom_call.1} parent=5 // pred_check
        %p1875 = pneg %p1874
      $region90: #{tpu_custom_call.1} parent=5 // pred_check_branch
        %1877 = sbr.rel (%p1875) target = $region92
      $region91: #{tpu_custom_call.1} parent=5 // pred_region
        %s1878 = ssub.s32 %s27, 2
        // Predicated region
        $region93: #{tpu_custom_call.1} parent=91 // pred_check
          %p1879 = pneg %p276
        $region94: #{tpu_custom_call.1} parent=91 // pred_check_branch
          %1881 = sbr.rel (%p1879) target = $region96
        $region95: #{tpu_custom_call.1} parent=91 // pred_region
          %s1882 = sand.u32 %s261, 1
          %s1883 = scalar_lea.sflag [#allocation4], %s1882
          %s1884 = sand.u32 %s261, 1
          %s1885 = smul.addr %s1884, 32
          %s1886 = scalar_lea.vmem [#allocation13], %s1885
          %1888 = dma.done %s1883, 512
        $region96: #{tpu_custom_call.1} parent=91 // pred_fallthru
          _
      $region92: #{tpu_custom_call.1} parent=5 // pred_fallthru
        _
    $region6: #{tpu_custom_call.1} parent=1 // loop_footer
      %s31 = sadd.s32 1, %s27
    $region7: #{tpu_custom_call.1} parent=1 // loop_footer_branch
      %26 = sbr.rel target = $region3
    $region8: #{tpu_custom_call.1} parent=1 // loop_exit
      _
    %1889 = vsyncpa [#allocation3], 1
    %s1890 = scalar_lea.sflag [#allocation3], 1
    %1891 = vsyncpa %s1890, 1
    %1892 = vsyncpa [#allocation6], 1
    %s1893 = scalar_lea.sflag [#allocation6], 1
    %1894 = vsyncpa %s1893, 1
    %1895 = vsyncpa [#allocation9], 1
    %1896 = vsyncpa [#allocation12], 1
    %1897 = vsyncpa [#allocation4], 1
    %s1898 = scalar_lea.sflag [#allocation4], 1
    %1899 = vsyncpa %s1898, 1

</llo_original>
